<compile_context>
chip_gen: v6e
topology: v6e:2x2x1
jax: 0.10.0
libtpu: 0.0.40
codegen_flags: <defaults>
</compile_context>

<pallas_src>
import functools

import jax
import jax.numpy as jnp
from jax.experimental import pallas as pl
from jax.experimental.pallas import tpu as pltpu


LEAKY_SLOPE = 0.2
LANE = 128


def _round_up(x, m):
    return (x + m - 1) // m * m


# -----------------------------------------------------------------------------
# Weight packing (runs ONCE, outside the per-forward hot path).
# -----------------------------------------------------------------------------
def _conv_as_matrix(w, H, W, stride=2, pad=1):
    """Fold a (kh, kw, cin, cout) conv into a dense matrix T so that
    flat_out = flat_in @ T, with NCHW flattening (c-major, row-major spatial)
    on both sides.  Zero padding is handled implicitly (out-of-range taps never
    match)."""
    kh, kw, cin, cout = w.shape
    Ho = (H + 2 * pad - kh) // stride + 1
    Wo = (W + 2 * pad - kw) // stride + 1

    ih = jnp.arange(H)[:, None, None]
    oh = jnp.arange(Ho)[None, None, :]
    kh_i = jnp.arange(kh)[None, :, None]
    A_h = (ih == stride * oh - pad + kh_i).astype(jnp.float32)   # (H, kh, Ho)

    iw = jnp.arange(W)[:, None, None]
    ow = jnp.arange(Wo)[None, None, :]
    kw_i = jnp.arange(kw)[None, :, None]
    A_w = (iw == stride * ow - pad + kw_i).astype(jnp.float32)   # (W, kw, Wo)

    # T[ci, ih, iw, co, oh, ow] = sum_{kh,kw} A_h * A_w * w[kh, kw, ci, co]
    T = jnp.einsum("hko,wlp,klcd->chwdop", A_h, A_w, w.astype(jnp.float32))
    return T.reshape(cin * H * W, cout * Ho * Wo), Ho, Wo


def pack_params(params, H, W, mm_dtype=jnp.bfloat16, eps=1e-5):
    _, _, _, c1 = params["conv1_w"].shape
    _, _, _, c2 = params["conv2_w"].shape
    E = params["fc_w"].shape[1]
    EP = _round_up(E, LANE)

    T1, Ho1, Wo1 = _conv_as_matrix(params["conv1_w"], H, W)
    T2, Ho2, Wo2 = _conv_as_matrix(params["conv2_w"], Ho1, Wo1)
    N1 = c1 * Ho1 * Wo1
    N2 = c2 * Ho2 * Wo2

    # Per-channel conv biases broadcast over spatial positions (channel-major).
    b1 = jnp.repeat(params["conv1_b"], Ho1 * Wo1).reshape(1, N1)
    b2 = jnp.repeat(params["conv2_b"], Ho2 * Wo2).reshape(1, N2)

    # Global average pool + FC folded into one matrix (lane-padded to 128).
    S = Ho2 * Wo2
    P = jnp.repeat(params["fc_w"], S, axis=0) / float(S)          # (N2, E)
    P = jnp.pad(P, ((0, 0), (0, EP - E)))
    pb = jnp.pad(params["fc_b"], (0, EP - E)).reshape(1, EP)

    # Eval-mode BatchNorm + 1-logit classifier folded to (v, c0):
    #   logit = sum(d * v, axis=-1) + c0,   d = (f1 - f2)^2
    scale = params["bn_gamma"] / jnp.sqrt(params["bn_var"] + eps)
    shift = params["bn_beta"] - params["bn_mean"] * scale
    v = jnp.pad(scale * params["cls_w"], (0, EP - E)).reshape(1, EP)
    c0 = (jnp.sum(shift * params["cls_w"]) + params["cls_b"][0]).reshape(1, 1)

    f32 = jnp.float32
    return {
        "t1": T1.astype(mm_dtype), "b1": b1.astype(f32),
        "t2": T2.astype(mm_dtype), "b2": b2.astype(f32),
        # P kept fp32: the (f1-f2)^2 head is cancellation-sensitive and this
        # matmul is tiny, so fp32 here costs nothing.
        "p": P.astype(f32), "pb": pb.astype(f32),
        "v": v.astype(f32), "c0": c0.astype(f32),
    }


# -----------------------------------------------------------------------------
# The single fused kernel: encoder (both images) + verification head.
# -----------------------------------------------------------------------------
def _fused_id_disc_kernel(x1_ref, x2_ref, t1_ref, b1_ref, t2_ref, b2_ref,
                          p_ref, pb_ref, v_ref, c0_ref, o_ref, xbuf,
                          *, slope):
    tb = x1_ref.shape[0]

    # Merge the img1/img2 row tiles into one bf16 staging buffer so each
    # encoder matmul runs once with M = 2*TB (weights stream through the MXU a
    # single time per step).  bf16 scratch halves the vst/vld traffic vs fp32.
    xbuf[pl.ds(0, tb), :] = x1_ref[...].astype(jnp.bfloat16)
    xbuf[pl.ds(tb, tb), :] = x2_ref[...].astype(jnp.bfloat16)
    x = xbuf[...]                                             # (2*tb, S1) bf16

    # conv1 (3x3/s2, pad 1) folded to a lane-dense matmul + bias + LeakyReLU.
    h = jnp.dot(x, t1_ref[...], preferred_element_type=jnp.float32)
    h = h + b1_ref[...]
    h = jnp.maximum(h, slope * h)               # LeakyReLU (0 < slope < 1)

    # conv2 (3x3/s2, pad 1) + bias + LeakyReLU.
    h = jnp.dot(h.astype(jnp.bfloat16), t2_ref[...],
                preferred_element_type=jnp.float32)
    h = h + b2_ref[...]
    h = jnp.maximum(h, slope * h)

    # Global average pool + FC folded into one small fp32 matmul.
    f = jnp.dot(h, p_ref[...], preferred_element_type=jnp.float32)
    f = f + pb_ref[...]                                       # (2*tb, EP) fp32

    # Verification head: d = (f1 - f2)^2 ; folded eval-BN + classifier.
    # tb is a multiple of 16, so these static row slices stay tile-aligned.
    d = f[:tb, :] - f[tb:, :]
    d = d * d
    logit = jnp.sum(d * v_ref[...], axis=-1, keepdims=True) + c0_ref[...]
    o_ref[...] = logit.astype(o_ref.dtype)


def id_discriminator_forward(img1_nchw, img2_nchw, packed, *, tile_b=256):
    B = img1_nchw.shape[0]
    # NCHW flattening; the layout handling is folded into the packed T1.
    x1 = img1_nchw.reshape(B, -1)
    x2 = img2_nchw.reshape(B, -1)
    S1, N1 = packed["t1"].shape
    N2 = packed["t2"].shape[1]
    EP = packed["p"].shape[1]
    assert x1.shape[1] == S1

    # Batch tile: a multiple of 16 (bf16 sublane tiling of the merged scratch),
    # at most ~B/2 so the parallel grid has >= 2 steps when the batch allows it
    # (so v7x's two TensorCores both get work), and capped at tile_b (default
    # 256 -> M = 2*TB = 512 rows per matmul).  Pad B so every tile is full.
    TB = max(16, min(tile_b, _round_up(max(B // 2, 1), 16)))
    Bp = _round_up(B, TB)
    if Bp != B:
        pad = ((0, Bp - B), (0, 0))
        x1 = jnp.pad(x1, pad)
        x2 = jnp.pad(x2, pad)
    n_tiles = Bp // TB

    const = lambda i: (0, 0)
    kern = functools.partial(_fused_id_disc_kernel, slope=LEAKY_SLOPE)
    out = pl.pallas_call(
        kern,
        out_shape=jax.ShapeDtypeStruct((Bp, 1), jnp.float32),
        grid_spec=pltpu.PrefetchScalarGridSpec(
            num_scalar_prefetch=0,
            grid=(n_tiles,),
            in_specs=[
                pl.BlockSpec((TB, S1), lambda i: (i, 0)),    # img1 rows (fp32)
                pl.BlockSpec((TB, S1), lambda i: (i, 0)),    # img2 rows (fp32)
                pl.BlockSpec((S1, N1), const),               # conv1 as matrix (bf16)
                pl.BlockSpec((1, N1), const),                # conv1 bias row
                pl.BlockSpec((N1, N2), const),               # conv2 as matrix (bf16)
                pl.BlockSpec((1, N2), const),                # conv2 bias row
                pl.BlockSpec((N2, EP), const),               # pool + fc (fp32)
                pl.BlockSpec((1, EP), const),                # fc bias row (padded)
                pl.BlockSpec((1, EP), const),                # folded BN*classifier scale
                pl.BlockSpec((1, 1), const),                 # folded constant term
            ],
            out_specs=pl.BlockSpec((TB, 1), lambda i: (i, 0)),
            scratch_shapes=[
                pltpu.VMEM((2 * TB, S1), jnp.bfloat16),      # merged bf16 image rows
            ],
        ),
        compiler_params=pltpu.CompilerParams(
            dimension_semantics=("parallel",),
            vmem_limit_bytes=32 * 1024 * 1024,
        ),
    )(x1, x2, packed["t1"], packed["b1"], packed["t2"], packed["b2"],
      packed["p"], packed["pb"], packed["v"], packed["c0"])

    return out[:B]


# -----------------------------------------------------------------------------
# Plain-JAX references (for in-script validation only).
# -----------------------------------------------------------------------------
def reference_forward(img1, img2, params, eps=1e-5):
    def conv(x, w, b):
        y = jax.lax.conv_general_dilated(
            x, w, window_strides=(2, 2), padding=((1, 1), (1, 1)),
            dimension_numbers=("NCHW", "HWIO", "NCHW"))
        return y + b[None, :, None, None]

    def encoder(x):
        h = conv(x, params["conv1_w"], params["conv1_b"])
        h = jnp.where(h >= 0, h, LEAKY_SLOPE * h)
        h = conv(h, params["conv2_w"], params["conv2_b"])
        h = jnp.where(h >= 0, h, LEAKY_SLOPE * h)
        pooled = h.mean(axis=(2, 3))
        return pooled @ params["fc_w"] + params["fc_b"]

    f1, f2 = encoder(img1), encoder(img2)
    d = (f1 - f2) ** 2
    scale = params["bn_gamma"] / jnp.sqrt(params["bn_var"] + eps)
    d = (d - params["bn_mean"]) * scale + params["bn_beta"]
    return d @ params["cls_w"][:, None] + params["cls_b"]


def packed_forward_ref(x1, x2, packed):
    t1 = packed["t1"].astype(jnp.float32)
    t2 = packed["t2"].astype(jnp.float32)
    p = packed["p"].astype(jnp.float32)

    def enc(x):
        h = x @ t1 + packed["b1"]
        h = jnp.where(h >= 0, h, LEAKY_SLOPE * h)
        h = h @ t2 + packed["b2"]
        h = jnp.where(h >= 0, h, LEAKY_SLOPE * h)
        return h @ p + packed["pb"]

    f1, f2 = enc(x1), enc(x2)
    d = (f1 - f2) ** 2
    return jnp.sum(d * packed["v"], axis=-1, keepdims=True) + packed["c0"]


# -----------------------------------------------------------------------------
# Synthetic parameters (deterministic).  NOTE: real PyTorch conv checkpoints
# are (cout, cin, kh, kw) and would need permuting to (kh, kw, cin, cout).
# -----------------------------------------------------------------------------
def init_params(key, in_ch=3, c1=8, c2=16, embed_dim=32):
    k = jax.random.split(key, 12)
    return {
        "conv1_w": 0.2 * jax.random.normal(k[0], (3, 3, in_ch, c1), jnp.float32),
        "conv1_b": 0.1 * jax.random.normal(k[1], (c1,), jnp.float32),
        "conv2_w": 0.2 * jax.random.normal(k[2], (3, 3, c1, c2), jnp.float32),
        "conv2_b": 0.1 * jax.random.normal(k[3], (c2,), jnp.float32),
        "fc_w": 0.3 * jax.random.normal(k[4], (c2, embed_dim), jnp.float32),
        "fc_b": 0.1 * jax.random.normal(k[5], (embed_dim,), jnp.float32),
        # Verification head (SiameseNet / EltwiseSubEmbed, num_class=1), BN eval.
        "bn_gamma": 1.0 + 0.1 * jax.random.normal(k[6], (embed_dim,), jnp.float32),
        "bn_beta": 0.05 * jax.random.normal(k[7], (embed_dim,), jnp.float32),
        "bn_mean": 0.05 * jax.random.normal(k[8], (embed_dim,), jnp.float32),
        "bn_var": 1.0 + 0.1 * jax.random.uniform(k[9], (embed_dim,), jnp.float32),
        "cls_w": 0.2 * jax.random.normal(k[10], (embed_dim,), jnp.float32),
        "cls_b": 0.1 * jax.random.normal(k[11], (1,), jnp.float32),
    }


# TODO(synk): num_parts != 0 branch (PartSiameseNet over body-part features)
# and load_verification() checkpoint surgery are not implemented; this covers
# the num_parts == 0 (SiameseNet) configuration.

if __name__ == "__main__":
    key = jax.random.PRNGKey(0)
    kp, k1, k2 = jax.random.split(key, 3)

    batch, in_ch, spatial, embed_dim = 2, 3, 16, 32
    c1, c2 = 8, 16

    params = init_params(kp, in_ch=in_ch, c1=c1, c2=c2, embed_dim=embed_dim)
    packed_bf16 = pack_params(params, H=spatial, W=spatial, mm_dtype=jnp.bfloat16)
    packed_f32 = pack_params(params, H=spatial, W=spatial, mm_dtype=jnp.float32)

    img1 = jax.random.normal(k1, (batch, in_ch, spatial, spatial), jnp.float32)
    img2 = jax.random.normal(k2, (batch, in_ch, spatial, spatial), jnp.float32)

    # Fused Pallas forward.
    logit = jax.jit(id_discriminator_forward)(img1, img2, packed_bf16)
    jax.block_until_ready(logit)
    assert logit.shape == (batch, 1)

    # Check A: the weight folding (conv->matrix, pool+FC, BN+classifier) is
    # exact (fp32) against a plain-JAX conv reference.
    ref_conv = reference_forward(img1, img2, params)
    ref_fold = packed_forward_ref(img1.reshape(batch, -1),
                                  img2.reshape(batch, -1), packed_f32)
    err_a = float(jnp.max(jnp.abs(ref_conv - ref_fold)))
    assert err_a <= 1e-3 * (1.0 + float(jnp.max(jnp.abs(ref_conv)))), err_a

    # Check B: the Pallas kernel matches the same folded math; the only
    # difference is bf16 rounding of the conv-matmul inputs (fp32 accumulate,
    # fp32 pool+FC and verification head).
    ref_kern = packed_forward_ref(img1.reshape(batch, -1),
                                  img2.reshape(batch, -1), packed_bf16)
    err_b = float(jnp.max(jnp.abs(logit - ref_kern)))
    assert err_b <= 0.05 * (1.0 + float(jnp.max(jnp.abs(ref_kern)))), err_b

    print("KERNEL_OK")
</pallas_src>

<mosaic_0001>
module attributes {stable_mosaic.version = 11 : i64} {
  func.func @_fused_id_disc_kernel(%arg0: i32, %arg1: memref<16x768xf32, #tpu.memory_space<vmem>>, %arg2: memref<16x768xf32, #tpu.memory_space<vmem>>, %arg3: memref<768x512xbf16, #tpu.memory_space<vmem>>, %arg4: memref<1x512xf32, #tpu.memory_space<vmem>>, %arg5: memref<512x256xbf16, #tpu.memory_space<vmem>>, %arg6: memref<1x256xf32, #tpu.memory_space<vmem>>, %arg7: memref<256x128xf32, #tpu.memory_space<vmem>>, %arg8: memref<1x128xf32, #tpu.memory_space<vmem>>, %arg9: memref<1x128xf32, #tpu.memory_space<vmem>>, %arg10: memref<1x1xf32, #tpu.memory_space<vmem>>, %arg11: memref<16x1xf32, #tpu.memory_space<vmem>>, %arg12: memref<32x768xbf16, #tpu.memory_space<vmem>>) attributes {dimension_semantics = [#tpu.dimension_semantics<parallel>], iteration_bounds = array<i64: 1>, scalar_prefetch = 0 : i64, scratch_operands = 1 : i64, tpu.core_type = #tpu.core_type<tc>, window_params = [{transform_indices = @transform_0, window_bounds = array<i64: 16, 768>}, {transform_indices = @transform_1, window_bounds = array<i64: 16, 768>}, {pipeline_mode = #tpu.pipeline_mode<synchronous>, transform_indices = @transform_2, window_bounds = array<i64: 768, 512>}, {pipeline_mode = #tpu.pipeline_mode<synchronous>, transform_indices = @transform_3, window_bounds = array<i64: 1, 512>}, {pipeline_mode = #tpu.pipeline_mode<synchronous>, transform_indices = @transform_4, window_bounds = array<i64: 512, 256>}, {pipeline_mode = #tpu.pipeline_mode<synchronous>, transform_indices = @transform_5, window_bounds = array<i64: 1, 256>}, {pipeline_mode = #tpu.pipeline_mode<synchronous>, transform_indices = @transform_6, window_bounds = array<i64: 256, 128>}, {pipeline_mode = #tpu.pipeline_mode<synchronous>, transform_indices = @transform_7, window_bounds = array<i64: 1, 128>}, {pipeline_mode = #tpu.pipeline_mode<synchronous>, transform_indices = @transform_8, window_bounds = array<i64: 1, 128>}, {pipeline_mode = #tpu.pipeline_mode<synchronous>, transform_indices = @transform_9, window_bounds = array<i64: 1, 1>}, {transform_indices = @transform_10, window_bounds = array<i64: 16, 1>}]} {
    %c0 = arith.constant 0 : index
    %c0_0 = arith.constant 0 : index
    %0 = vector.load %arg1[%c0, %c0_0] : memref<16x768xf32, #tpu.memory_space<vmem>>, vector<16x768xf32>
    %1 = arith.truncf %0 : vector<16x768xf32> to vector<16x768xbf16>
    %c0_1 = arith.constant 0 : index
    %c0_2 = arith.constant 0 : index
    %2 = vector.load %arg12[%c0_1, %c0_2] : memref<32x768xbf16, #tpu.memory_space<vmem>>, vector<16x768xbf16>
    tpu.vector_store %arg12[%c0_1, %c0_2], %1 {strides = array<i32>} : memref<32x768xbf16, #tpu.memory_space<vmem>>, vector<16x768xbf16>,
    %c0_3 = arith.constant 0 : index
    %c0_4 = arith.constant 0 : index
    %3 = vector.load %arg2[%c0_3, %c0_4] : memref<16x768xf32, #tpu.memory_space<vmem>>, vector<16x768xf32>
    %4 = arith.truncf %3 : vector<16x768xf32> to vector<16x768xbf16>
    %c16 = arith.constant 16 : index
    %c0_5 = arith.constant 0 : index
    %5 = vector.load %arg12[%c16, %c0_5] : memref<32x768xbf16, #tpu.memory_space<vmem>>, vector<16x768xbf16>
    tpu.vector_store %arg12[%c16, %c0_5], %4 {strides = array<i32>} : memref<32x768xbf16, #tpu.memory_space<vmem>>, vector<16x768xbf16>,
    %c0_6 = arith.constant 0 : index
    %c0_7 = arith.constant 0 : index
    %6 = vector.load %arg12[%c0_6, %c0_7] : memref<32x768xbf16, #tpu.memory_space<vmem>>, vector<32x768xbf16>
    %c0_8 = arith.constant 0 : index
    %c0_9 = arith.constant 0 : index
    %7 = vector.load %arg3[%c0_8, %c0_9] : memref<768x512xbf16, #tpu.memory_space<vmem>>, vector<768x512xbf16>
    %cst = arith.constant dense<0.000000e+00> : vector<32x512xf32>
    %8 = tpu.matmul %6, %7, %cst {dimension_numbers = #tpu.dot_dimension_numbers<[1], [0], [0], [1], [0, 0, 1, 1], [], []>} : vector<32x768xbf16>, vector<768x512xbf16>, vector<32x512xf32> -> vector<32x512xf32>
    %c0_10 = arith.constant 0 : index
    %c0_11 = arith.constant 0 : index
    %9 = vector.load %arg4[%c0_10, %c0_11] : memref<1x512xf32, #tpu.memory_space<vmem>>, vector<1x512xf32>
    %10 = vector.broadcast %9 : vector<1x512xf32> to vector<32x512xf32>
    %11 = arith.addf %8, %10 : vector<32x512xf32>
    %cst_12 = arith.constant 2.000000e-01 : f32
    %12 = vector.broadcast %cst_12 : f32 to vector<32x512xf32>
    %13 = arith.mulf %12, %11 : vector<32x512xf32>
    %14 = arith.maximumf %11, %13 : vector<32x512xf32>
    %15 = arith.truncf %14 : vector<32x512xf32> to vector<32x512xbf16>
    %c0_13 = arith.constant 0 : index
    %c0_14 = arith.constant 0 : index
    %16 = vector.load %arg5[%c0_13, %c0_14] : memref<512x256xbf16, #tpu.memory_space<vmem>>, vector<512x256xbf16>
    %cst_15 = arith.constant dense<0.000000e+00> : vector<32x256xf32>
    %17 = tpu.matmul %15, %16, %cst_15 {dimension_numbers = #tpu.dot_dimension_numbers<[1], [0], [0], [1], [0, 0, 1, 1], [], []>} : vector<32x512xbf16>, vector<512x256xbf16>, vector<32x256xf32> -> vector<32x256xf32>
    %c0_16 = arith.constant 0 : index
    %c0_17 = arith.constant 0 : index
    %18 = vector.load %arg6[%c0_16, %c0_17] : memref<1x256xf32, #tpu.memory_space<vmem>>, vector<1x256xf32>
    %19 = vector.broadcast %18 : vector<1x256xf32> to vector<32x256xf32>
    %20 = arith.addf %17, %19 : vector<32x256xf32>
    %cst_18 = arith.constant 2.000000e-01 : f32
    %21 = vector.broadcast %cst_18 : f32 to vector<32x256xf32>
    %22 = arith.mulf %21, %20 : vector<32x256xf32>
    %23 = arith.maximumf %20, %22 : vector<32x256xf32>
    %c0_19 = arith.constant 0 : index
    %c0_20 = arith.constant 0 : index
    %24 = vector.load %arg7[%c0_19, %c0_20] : memref<256x128xf32, #tpu.memory_space<vmem>>, vector<256x128xf32>
    %cst_21 = arith.constant dense<0.000000e+00> : vector<32x128xf32>
    %25 = tpu.matmul %23, %24, %cst_21 {dimension_numbers = #tpu.dot_dimension_numbers<[1], [0], [0], [1], [0, 0, 1, 1], [], []>} : vector<32x256xf32>, vector<256x128xf32>, vector<32x128xf32> -> vector<32x128xf32>
    %c0_22 = arith.constant 0 : index
    %c0_23 = arith.constant 0 : index
    %26 = vector.load %arg8[%c0_22, %c0_23] : memref<1x128xf32, #tpu.memory_space<vmem>>, vector<1x128xf32>
    %27 = vector.broadcast %26 : vector<1x128xf32> to vector<32x128xf32>
    %28 = arith.addf %25, %27 : vector<32x128xf32>
    %29 = vector.extract_strided_slice %28 {offsets = [0, 0], sizes = [16, 128], strides = [1, 1]} : vector<32x128xf32> to vector<16x128xf32>
    %30 = vector.extract_strided_slice %28 {offsets = [16, 0], sizes = [16, 128], strides = [1, 1]} : vector<32x128xf32> to vector<16x128xf32>
    %31 = arith.subf %29, %30 : vector<16x128xf32>
    %32 = arith.mulf %31, %31 : vector<16x128xf32>
    %c0_24 = arith.constant 0 : index
    %c0_25 = arith.constant 0 : index
    %33 = vector.load %arg9[%c0_24, %c0_25] : memref<1x128xf32, #tpu.memory_space<vmem>>, vector<1x128xf32>
    %34 = vector.broadcast %33 : vector<1x128xf32> to vector<16x128xf32>
    %35 = arith.mulf %32, %34 : vector<16x128xf32>
    %cst_26 = arith.constant dense<0.000000e+00> : vector<16xf32>
    %36 = vector.multi_reduction <add>, %35, %cst_26 [1] : vector<16x128xf32> to vector<16xf32>
    %37 = vector.shape_cast %36 : vector<16xf32> to vector<16x1xf32>
    %c0_27 = arith.constant 0 : index
    %c0_28 = arith.constant 0 : index
    %38 = vector.load %arg10[%c0_27, %c0_28] : memref<1x1xf32, #tpu.memory_space<vmem>>, vector<1x1xf32>
    %39 = vector.broadcast %38 : vector<1x1xf32> to vector<16x1xf32>
    %40 = arith.addf %37, %39 : vector<16x1xf32>
    %c0_29 = arith.constant 0 : index
    %c0_30 = arith.constant 0 : index
    %41 = vector.load %arg11[%c0_29, %c0_30] : memref<16x1xf32, #tpu.memory_space<vmem>>, vector<16x1xf32>
    tpu.vector_store %arg11[%c0_29, %c0_30], %40 {strides = array<i32>} : memref<16x1xf32, #tpu.memory_space<vmem>>, vector<16x1xf32>,
    return
  }
  func.func @transform_0(%arg0: i32) -> (i32, i32) {
    %c0_i32 = arith.constant 0 : i32
    %c0_i32_0 = arith.constant 0 : i32
    return %arg0, %c0_i32 : i32, i32
  }
  func.func @transform_1(%arg0: i32) -> (i32, i32) {
    %c0_i32 = arith.constant 0 : i32
    %c0_i32_0 = arith.constant 0 : i32
    return %arg0, %c0_i32 : i32, i32
  }
  func.func @transform_2(%arg0: i32) -> (i32, i32) {
    %c0_i32 = arith.constant 0 : i32
    %c0_i32_0 = arith.constant 0 : i32
    %c0_i32_1 = arith.constant 0 : i32
    return %c0_i32, %c0_i32_0 : i32, i32
  }
  func.func @transform_3(%arg0: i32) -> (i32, i32) {
    %c0_i32 = arith.constant 0 : i32
    %c0_i32_0 = arith.constant 0 : i32
    %c0_i32_1 = arith.constant 0 : i32
    return %c0_i32, %c0_i32_0 : i32, i32
  }
  func.func @transform_4(%arg0: i32) -> (i32, i32) {
    %c0_i32 = arith.constant 0 : i32
    %c0_i32_0 = arith.constant 0 : i32
    %c0_i32_1 = arith.constant 0 : i32
    return %c0_i32, %c0_i32_0 : i32, i32
  }
  func.func @transform_5(%arg0: i32) -> (i32, i32) {
    %c0_i32 = arith.constant 0 : i32
    %c0_i32_0 = arith.constant 0 : i32
    %c0_i32_1 = arith.constant 0 : i32
    return %c0_i32, %c0_i32_0 : i32, i32
  }
  func.func @transform_6(%arg0: i32) -> (i32, i32) {
    %c0_i32 = arith.constant 0 : i32
    %c0_i32_0 = arith.constant 0 : i32
    %c0_i32_1 = arith.constant 0 : i32
    return %c0_i32, %c0_i32_0 : i32, i32
  }
  func.func @transform_7(%arg0: i32) -> (i32, i32) {
    %c0_i32 = arith.constant 0 : i32
    %c0_i32_0 = arith.constant 0 : i32
    %c0_i32_1 = arith.constant 0 : i32
    return %c0_i32, %c0_i32_0 : i32, i32
  }
  func.func @transform_8(%arg0: i32) -> (i32, i32) {
    %c0_i32 = arith.constant 0 : i32
    %c0_i32_0 = arith.constant 0 : i32
    %c0_i32_1 = arith.constant 0 : i32
    return %c0_i32, %c0_i32_0 : i32, i32
  }
  func.func @transform_9(%arg0: i32) -> (i32, i32) {
    %c0_i32 = arith.constant 0 : i32
    %c0_i32_0 = arith.constant 0 : i32
    %c0_i32_1 = arith.constant 0 : i32
    return %c0_i32, %c0_i32_0 : i32, i32
  }
  func.func @transform_10(%arg0: i32) -> (i32, i32) {
    %c0_i32 = arith.constant 0 : i32
    %c0_i32_0 = arith.constant 0 : i32
    return %arg0, %c0_i32 : i32, i32
  }
}

</mosaic_0001>

<llo_original>
// kernel: id_discriminator_forward.1
$region0: #{id_discriminator_forward.1}
  #allocation0 [shape = 'u32[]', space=smem, size = 0x4, offset = 0x4, fixed_abs, tag = 'smem constant byte address 0x4 - core index']
  #allocation1 [shape = 'u32[144,128]{1,0:T(1,128)}', space=vmem, size = 0x12000, scoped, tag = 'internal scratch']
  #allocation2 [shape = 'bf16[32,768]{1,0:T(8,128)(2,1)}', space=vmem, size = 0xc000, scoped, tag = 'scratch operand']
  #allocation3 [shape = 'f32[1,1]{1,0:T(1,128)S(1)}', space=vmem, size = 0x200, scoped, tag = 'scoped memory for id_discriminator_forward.1']
  %s0 = inlined_call_operand.vmem [shape: f32[16,768], index: 0, kind: input, shape index: {}]
  %s1 = inlined_call_operand.vmem [shape: f32[16,768], index: 1, kind: input, shape index: {}]
  %s2 = inlined_call_operand.hbm [shape: bf16[768,512], index: 2, kind: input, shape index: {}]
  %s3 = inlined_call_operand.vmem [shape: f32[1,512], index: 3, kind: input, shape index: {}]
  %s4 = inlined_call_operand.hbm [shape: bf16[512,256], index: 4, kind: input, shape index: {}]
  %s5 = inlined_call_operand.vmem [shape: f32[1,256], index: 5, kind: input, shape index: {}]
  %s6 = inlined_call_operand.vmem [shape: f32[256,128], index: 6, kind: input, shape index: {}]
  %s7 = inlined_call_operand.vmem [shape: f32[1,128], index: 7, kind: input, shape index: {}]
  %s8 = inlined_call_operand.vmem [shape: f32[1,128], index: 8, kind: input, shape index: {}]
  %s9 = inlined_call_operand.<no memory space> [shape: f32[1,1], index: 9, kind: input, shape index: {}]
  %s10 = inlined_call_operand.vmem [shape: f32[16,1], index: 10, kind: output, shape index: {}]
  %s11 = sld [smem:[#allocation0]]
  $region58: #{id_discriminator_forward.1} parent=0
    _
  %s13 = ssub.s32 1, %s11
  %s14 = scalar_select 0, %s13, %s11
  %v15 = vstv %s9
  %16 = vst [vmem:[#allocation3] sm:$0x1] %v15
  $region1: #{id_discriminator_forward.1} parent=0
    #allocation4 [shape = 'u8[786432]{0}', space=vmem, size = 0xc0000, scoped, tag = 'input window, operand 2, single buffered']
    #allocation5 [shape = 's32[1]{0}', space=sflag, size = 0x4, scoped, tag = 'scoped memory for id_discriminator_forward.1']
    #allocation6 [shape = 'u8[262144]{0}', space=vmem, size = 0x40000, scoped, tag = 'input window, operand 4, single buffered']
    #allocation7 [shape = 's32[1]{0}', space=sflag, size = 0x4, scoped, tag = 'scoped memory for id_discriminator_forward.1']
    %17 = vsyncpa [#allocation5], 0
    %18 = vsyncpa [#allocation7], 0
    // Predicated region
    $region2: #{id_discriminator_forward.1} parent=1 // pred_check
      _
    $region3: #{id_discriminator_forward.1} parent=1 // pred_check_branch
      %20 = sbr.rel (0) target = $region5
    $region4: #{id_discriminator_forward.1} parent=1 // pred_region
      _
    $region5: #{id_discriminator_forward.1} parent=1 // pred_fallthru
      _
    // Predicated region
    $region6: #{id_discriminator_forward.1} parent=1 // pred_check
      _
    $region7: #{id_discriminator_forward.1} parent=1 // pred_check_branch
      %22 = sbr.rel (0) target = $region9
    $region8: #{id_discriminator_forward.1} parent=1 // pred_region
      _
    $region9: #{id_discriminator_forward.1} parent=1 // pred_fallthru
      _
    // Predicated region
    $region10: #{id_discriminator_forward.1} parent=1 // pred_check
      _
    $region11: #{id_discriminator_forward.1} parent=1 // pred_check_branch
      %24 = sbr.rel (0) target = $region13
    $region12: #{id_discriminator_forward.1} parent=1 // pred_region
      %s26 = ssub.s32 24576, 24576
      %27 = vsyncadd [#allocation5], %s26
      %s28 = sshll.u32 [#allocation4], 4
      %s29 = int_to_ptr.vmem [resolvable:$true] %s28
      %34 = dma.hbm_to_vmem [thread:$0]  %s2, 24576, %s29, [#allocation5], 256, 256, 16
    $region13: #{id_discriminator_forward.1} parent=1 // pred_fallthru
      _
    // Predicated region
    $region14: #{id_discriminator_forward.1} parent=1 // pred_check
      _
    $region15: #{id_discriminator_forward.1} parent=1 // pred_check_branch
      %36 = sbr.rel (0) target = $region17
    $region16: #{id_discriminator_forward.1} parent=1 // pred_region
      _
    $region17: #{id_discriminator_forward.1} parent=1 // pred_fallthru
      _
    // Predicated region
    $region18: #{id_discriminator_forward.1} parent=1 // pred_check
      _
    $region19: #{id_discriminator_forward.1} parent=1 // pred_check_branch
      %38 = sbr.rel (0) target = $region21
    $region20: #{id_discriminator_forward.1} parent=1 // pred_region
      %s40 = ssub.s32 8192, 8192
      %41 = vsyncadd [#allocation7], %s40
      %s42 = sshll.u32 [#allocation6], 4
      %s43 = int_to_ptr.vmem [resolvable:$true] %s42
      %48 = dma.hbm_to_vmem [thread:$0]  %s4, 8192, %s43, [#allocation7], 128, 128, 8
    $region21: #{id_discriminator_forward.1} parent=1 // pred_fallthru
      _
    // Predicated region
    $region22: #{id_discriminator_forward.1} parent=1 // pred_check
      _
    $region23: #{id_discriminator_forward.1} parent=1 // pred_check_branch
      %50 = sbr.rel (0) target = $region25
    $region24: #{id_discriminator_forward.1} parent=1 // pred_region
      _
    $region25: #{id_discriminator_forward.1} parent=1 // pred_fallthru
      _
    // Predicated region
    $region26: #{id_discriminator_forward.1} parent=1 // pred_check
      _
    $region27: #{id_discriminator_forward.1} parent=1 // pred_check_branch
      %52 = sbr.rel (0) target = $region29
    $region28: #{id_discriminator_forward.1} parent=1 // pred_region
      _
    $region29: #{id_discriminator_forward.1} parent=1 // pred_fallthru
      _
    // Predicated region
    $region30: #{id_discriminator_forward.1} parent=1 // pred_check
      _
    $region31: #{id_discriminator_forward.1} parent=1 // pred_check_branch
      %54 = sbr.rel (0) target = $region33
    $region32: #{id_discriminator_forward.1} parent=1 // pred_region
      _
    $region33: #{id_discriminator_forward.1} parent=1 // pred_fallthru
      _
    // Predicated region
    $region34: #{id_discriminator_forward.1} parent=1 // pred_check
      _
    $region35: #{id_discriminator_forward.1} parent=1 // pred_check_branch
      %56 = sbr.rel (0) target = $region37
    $region36: #{id_discriminator_forward.1} parent=1 // pred_region
      _
    $region37: #{id_discriminator_forward.1} parent=1 // pred_fallthru
      _
    // Predicated region
    $region38: #{id_discriminator_forward.1} parent=1 // pred_check
      _
    $region39: #{id_discriminator_forward.1} parent=1 // pred_check_branch
      %58 = sbr.rel (0) target = $region41
    $region40: #{id_discriminator_forward.1} parent=1 // pred_region
      _
    $region41: #{id_discriminator_forward.1} parent=1 // pred_fallthru
      _
    // Predicated region
    $region42: #{id_discriminator_forward.1} parent=1 // pred_check
      _
    $region43: #{id_discriminator_forward.1} parent=1 // pred_check_branch
      %60 = sbr.rel (0) target = $region45
    $region44: #{id_discriminator_forward.1} parent=1 // pred_region
      %61 = dma.done [#allocation5], 24576
    $region45: #{id_discriminator_forward.1} parent=1 // pred_fallthru
      _
    // Predicated region
    $region46: #{id_discriminator_forward.1} parent=1 // pred_check
      _
    $region47: #{id_discriminator_forward.1} parent=1 // pred_check_branch
      %63 = sbr.rel (0) target = $region49
    $region48: #{id_discriminator_forward.1} parent=1 // pred_region
      %64 = dma.done [#allocation7], 8192
    $region49: #{id_discriminator_forward.1} parent=1 // pred_fallthru
      _
    %v65 = vld [vmem:[%s0] sm:$0xff]
    %v66 = vld [vmem:[%s0 + $0x8] sm:$0xff]
    %v67 = vld [vmem:[%s0 + $0x10] sm:$0xff]
    %v68 = vld [vmem:[%s0 + $0x18] sm:$0xff]
    %v69 = vld [vmem:[%s0 + $0x20] sm:$0xff]
    %v70 = vld [vmem:[%s0 + $0x28] sm:$0xff]
    %v71 = vld [vmem:[%s0 + $0x30] sm:$0xff]
    %v72 = vld [vmem:[%s0 + $0x38] sm:$0xff]
    %v73 = vld [vmem:[%s0 + $0x40] sm:$0xff]
    %v74 = vld [vmem:[%s0 + $0x48] sm:$0xff]
    %v75 = vld [vmem:[%s0 + $0x50] sm:$0xff]
    %v76 = vld [vmem:[%s0 + $0x58] sm:$0xff]
    %v77 = vpack.c.bf16 %v71, %v65
    %v78 = vpack.c.bf16 %v72, %v66
    %v79 = vpack.c.bf16 %v73, %v67
    %v80 = vpack.c.bf16 %v74, %v68
    %v81 = vpack.c.bf16 %v75, %v69
    %v82 = vpack.c.bf16 %v76, %v70
    %v89 = vunpack.c.l.b16 %v77
    %v90 = vunpack.c.l.b16 %v78
    %v91 = vunpack.c.l.b16 %v79
    %v92 = vunpack.c.l.b16 %v80
    %v93 = vunpack.c.l.b16 %v81
    %v94 = vunpack.c.l.b16 %v82
    %v95 = vunpack.c.h.b16 %v77
    %v96 = vunpack.c.h.b16 %v78
    %v97 = vunpack.c.h.b16 %v79
    %v98 = vunpack.c.h.b16 %v80
    %v99 = vunpack.c.h.b16 %v81
    %v100 = vunpack.c.h.b16 %v82
    %v101 = vpack.c.b16 %v90, %v89
    %v102 = vpack.c.b16 %v92, %v91
    %v103 = vpack.c.b16 %v94, %v93
    %v104 = vpack.c.b16 %v96, %v95
    %v105 = vpack.c.b16 %v98, %v97
    %v106 = vpack.c.b16 %v100, %v99
    %113 = vst [vmem:[#allocation2] sm:$0xff] %v101
    %114 = vst [vmem:[#allocation2 + $0x8] sm:$0xff] %v102
    %115 = vst [vmem:[#allocation2 + $0x10] sm:$0xff] %v103
    %116 = vst [vmem:[#allocation2 + $0x18] sm:$0xff] %v104
    %117 = vst [vmem:[#allocation2 + $0x20] sm:$0xff] %v105
    %118 = vst [vmem:[#allocation2 + $0x28] sm:$0xff] %v106
    %v119 = vld [vmem:[%s1] sm:$0xff]
    %v120 = vld [vmem:[%s1 + $0x8] sm:$0xff]
    %v121 = vld [vmem:[%s1 + $0x10] sm:$0xff]
    %v122 = vld [vmem:[%s1 + $0x18] sm:$0xff]
    %v123 = vld [vmem:[%s1 + $0x20] sm:$0xff]
    %v124 = vld [vmem:[%s1 + $0x28] sm:$0xff]
    %v125 = vld [vmem:[%s1 + $0x30] sm:$0xff]
    %v126 = vld [vmem:[%s1 + $0x38] sm:$0xff]
    %v127 = vld [vmem:[%s1 + $0x40] sm:$0xff]
    %v128 = vld [vmem:[%s1 + $0x48] sm:$0xff]
    %v129 = vld [vmem:[%s1 + $0x50] sm:$0xff]
    %v130 = vld [vmem:[%s1 + $0x58] sm:$0xff]
    %v131 = vpack.c.bf16 %v125, %v119
    %v132 = vpack.c.bf16 %v126, %v120
    %v133 = vpack.c.bf16 %v127, %v121
    %v134 = vpack.c.bf16 %v128, %v122
    %v135 = vpack.c.bf16 %v129, %v123
    %v136 = vpack.c.bf16 %v130, %v124
    %v143 = vunpack.c.l.b16 %v131
    %v144 = vunpack.c.l.b16 %v132
    %v145 = vunpack.c.l.b16 %v133
    %v146 = vunpack.c.l.b16 %v134
    %v147 = vunpack.c.l.b16 %v135
    %v148 = vunpack.c.l.b16 %v136
    %v149 = vunpack.c.h.b16 %v131
    %v150 = vunpack.c.h.b16 %v132
    %v151 = vunpack.c.h.b16 %v133
    %v152 = vunpack.c.h.b16 %v134
    %v153 = vunpack.c.h.b16 %v135
    %v154 = vunpack.c.h.b16 %v136
    %v155 = vpack.c.b16 %v144, %v143
    %v156 = vpack.c.b16 %v146, %v145
    %v157 = vpack.c.b16 %v148, %v147
    %v158 = vpack.c.b16 %v150, %v149
    %v159 = vpack.c.b16 %v152, %v151
    %v160 = vpack.c.b16 %v154, %v153
    %167 = vst [vmem:[#allocation2 + $0x30] sm:$0xff] %v155
    %168 = vst [vmem:[#allocation2 + $0x38] sm:$0xff] %v156
    %169 = vst [vmem:[#allocation2 + $0x40] sm:$0xff] %v157
    %170 = vst [vmem:[#allocation2 + $0x48] sm:$0xff] %v158
    %171 = vst [vmem:[#allocation2 + $0x50] sm:$0xff] %v159
    %172 = vst [vmem:[#allocation2 + $0x58] sm:$0xff] %v160
    %v173 = vld [vmem:[#allocation2] sm:$0xff]
    %v174 = vld [vmem:[#allocation2 + $0x8] sm:$0xff]
    %v175 = vld [vmem:[#allocation2 + $0x10] sm:$0xff]
    %v176 = vld [vmem:[#allocation2 + $0x18] sm:$0xff]
    %v177 = vld [vmem:[#allocation2 + $0x20] sm:$0xff]
    %v178 = vld [vmem:[#allocation2 + $0x28] sm:$0xff]
    %v179 = vld [vmem:[#allocation2 + $0x30] sm:$0xff]
    %v180 = vld [vmem:[#allocation2 + $0x38] sm:$0xff]
    %v181 = vld [vmem:[#allocation2 + $0x40] sm:$0xff]
    %v182 = vld [vmem:[#allocation2 + $0x48] sm:$0xff]
    %v183 = vld [vmem:[#allocation2 + $0x50] sm:$0xff]
    %v184 = vld [vmem:[#allocation2 + $0x58] sm:$0xff]
    %v185 = vld [vmem:[#allocation4] sm:$0xff]
    %v186 = vld [vmem:[#allocation4 + $0x8] sm:$0xff]
    %v187 = vld [vmem:[#allocation4 + $0x10] sm:$0xff]
    %v188 = vld [vmem:[#allocation4 + $0x18] sm:$0xff]
    %v189 = vld [vmem:[#allocation4 + $0x20] sm:$0xff]
    %v190 = vld [vmem:[#allocation4 + $0x28] sm:$0xff]
    %v191 = vld [vmem:[#allocation4 + $0x30] sm:$0xff]
    %v192 = vld [vmem:[#allocation4 + $0x38] sm:$0xff]
    %v193 = vld [vmem:[#allocation4 + $0x40] sm:$0xff]
    %v194 = vld [vmem:[#allocation4 + $0x48] sm:$0xff]
    %v195 = vld [vmem:[#allocation4 + $0x50] sm:$0xff]
    %v196 = vld [vmem:[#allocation4 + $0x58] sm:$0xff]
    %v197 = vld [vmem:[#allocation4 + $0x60] sm:$0xff]
    %v198 = vld [vmem:[#allocation4 + $0x68] sm:$0xff]
    %v199 = vld [vmem:[#allocation4 + $0x70] sm:$0xff]
    %v200 = vld [vmem:[#allocation4 + $0x78] sm:$0xff]
    %v201 = vld [vmem:[#allocation4 + $0x80] sm:$0xff]
    %v202 = vld [vmem:[#allocation4 + $0x88] sm:$0xff]
    %v203 = vld [vmem:[#allocation4 + $0x90] sm:$0xff]
    %v204 = vld [vmem:[#allocation4 + $0x98] sm:$0xff]
    %v205 = vld [vmem:[#allocation4 + $0xa0] sm:$0xff]
    %v206 = vld [vmem:[#allocation4 + $0xa8] sm:$0xff]
    %v207 = vld [vmem:[#allocation4 + $0xb0] sm:$0xff]
    %v208 = vld [vmem:[#allocation4 + $0xb8] sm:$0xff]
    %v209 = vld [vmem:[#allocation4 + $0xc0] sm:$0xff]
    %v210 = vld [vmem:[#allocation4 + $0xc8] sm:$0xff]
    %v211 = vld [vmem:[#allocation4 + $0xd0] sm:$0xff]
    %v212 = vld [vmem:[#allocation4 + $0xd8] sm:$0xff]
    %v213 = vld [vmem:[#allocation4 + $0xe0] sm:$0xff]
    %v214 = vld [vmem:[#allocation4 + $0xe8] sm:$0xff]
    %v215 = vld [vmem:[#allocation4 + $0xf0] sm:$0xff]
    %v216 = vld [vmem:[#allocation4 + $0xf8] sm:$0xff]
    %v217 = vld [vmem:[#allocation4 + $0x100] sm:$0xff]
    %v218 = vld [vmem:[#allocation4 + $0x108] sm:$0xff]
    %v219 = vld [vmem:[#allocation4 + $0x110] sm:$0xff]
    %v220 = vld [vmem:[#allocation4 + $0x118] sm:$0xff]
    %v221 = vld [vmem:[#allocation4 + $0x120] sm:$0xff]
    %v222 = vld [vmem:[#allocation4 + $0x128] sm:$0xff]
    %v223 = vld [vmem:[#allocation4 + $0x130] sm:$0xff]
    %v224 = vld [vmem:[#allocation4 + $0x138] sm:$0xff]
    %v225 = vld [vmem:[#allocation4 + $0x140] sm:$0xff]
    %v226 = vld [vmem:[#allocation4 + $0x148] sm:$0xff]
    %v227 = vld [vmem:[#allocation4 + $0x150] sm:$0xff]
    %v228 = vld [vmem:[#allocation4 + $0x158] sm:$0xff]
    %v229 = vld [vmem:[#allocation4 + $0x160] sm:$0xff]
    %v230 = vld [vmem:[#allocation4 + $0x168] sm:$0xff]
    %v231 = vld [vmem:[#allocation4 + $0x170] sm:$0xff]
    %v232 = vld [vmem:[#allocation4 + $0x178] sm:$0xff]
    %v233 = vld [vmem:[#allocation4 + $0x180] sm:$0xff]
    %v234 = vld [vmem:[#allocation4 + $0x188] sm:$0xff]
    %v235 = vld [vmem:[#allocation4 + $0x190] sm:$0xff]
    %v236 = vld [vmem:[#allocation4 + $0x198] sm:$0xff]
    %v237 = vld [vmem:[#allocation4 + $0x1a0] sm:$0xff]
    %v238 = vld [vmem:[#allocation4 + $0x1a8] sm:$0xff]
    %v239 = vld [vmem:[#allocation4 + $0x1b0] sm:$0xff]
    %v240 = vld [vmem:[#allocation4 + $0x1b8] sm:$0xff]
    %v241 = vld [vmem:[#allocation4 + $0x1c0] sm:$0xff]
    %v242 = vld [vmem:[#allocation4 + $0x1c8] sm:$0xff]
    %v243 = vld [vmem:[#allocation4 + $0x1d0] sm:$0xff]
    %v244 = vld [vmem:[#allocation4 + $0x1d8] sm:$0xff]
    %v245 = vld [vmem:[#allocation4 + $0x1e0] sm:$0xff]
    %v246 = vld [vmem:[#allocation4 + $0x1e8] sm:$0xff]
    %v247 = vld [vmem:[#allocation4 + $0x1f0] sm:$0xff]
    %v248 = vld [vmem:[#allocation4 + $0x1f8] sm:$0xff]
    %v249 = vld [vmem:[#allocation4 + $0x200] sm:$0xff]
    %v250 = vld [vmem:[#allocation4 + $0x208] sm:$0xff]
    %v251 = vld [vmem:[#allocation4 + $0x210] sm:$0xff]
    %v252 = vld [vmem:[#allocation4 + $0x218] sm:$0xff]
    %v253 = vld [vmem:[#allocation4 + $0x220] sm:$0xff]
    %v254 = vld [vmem:[#allocation4 + $0x228] sm:$0xff]
    %v255 = vld [vmem:[#allocation4 + $0x230] sm:$0xff]
    %v256 = vld [vmem:[#allocation4 + $0x238] sm:$0xff]
    %v257 = vld [vmem:[#allocation4 + $0x240] sm:$0xff]
    %v258 = vld [vmem:[#allocation4 + $0x248] sm:$0xff]
    %v259 = vld [vmem:[#allocation4 + $0x250] sm:$0xff]
    %v260 = vld [vmem:[#allocation4 + $0x258] sm:$0xff]
    %v261 = vld [vmem:[#allocation4 + $0x260] sm:$0xff]
    %v262 = vld [vmem:[#allocation4 + $0x268] sm:$0xff]
    %v263 = vld [vmem:[#allocation4 + $0x270] sm:$0xff]
    %v264 = vld [vmem:[#allocation4 + $0x278] sm:$0xff]
    %v265 = vld [vmem:[#allocation4 + $0x280] sm:$0xff]
    %v266 = vld [vmem:[#allocation4 + $0x288] sm:$0xff]
    %v267 = vld [vmem:[#allocation4 + $0x290] sm:$0xff]
    %v268 = vld [vmem:[#allocation4 + $0x298] sm:$0xff]
    %v269 = vld [vmem:[#allocation4 + $0x2a0] sm:$0xff]
    %v270 = vld [vmem:[#allocation4 + $0x2a8] sm:$0xff]
    %v271 = vld [vmem:[#allocation4 + $0x2b0] sm:$0xff]
    %v272 = vld [vmem:[#allocation4 + $0x2b8] sm:$0xff]
    %v273 = vld [vmem:[#allocation4 + $0x2c0] sm:$0xff]
    %v274 = vld [vmem:[#allocation4 + $0x2c8] sm:$0xff]
    %v275 = vld [vmem:[#allocation4 + $0x2d0] sm:$0xff]
    %v276 = vld [vmem:[#allocation4 + $0x2d8] sm:$0xff]
    %v277 = vld [vmem:[#allocation4 + $0x2e0] sm:$0xff]
    %v278 = vld [vmem:[#allocation4 + $0x2e8] sm:$0xff]
    %v279 = vld [vmem:[#allocation4 + $0x2f0] sm:$0xff]
    %v280 = vld [vmem:[#allocation4 + $0x2f8] sm:$0xff]
    %v281 = vld [vmem:[#allocation4 + $0x300] sm:$0xff]
    %v282 = vld [vmem:[#allocation4 + $0x308] sm:$0xff]
    %v283 = vld [vmem:[#allocation4 + $0x310] sm:$0xff]
    %v284 = vld [vmem:[#allocation4 + $0x318] sm:$0xff]
    %v285 = vld [vmem:[#allocation4 + $0x320] sm:$0xff]
    %v286 = vld [vmem:[#allocation4 + $0x328] sm:$0xff]
    %v287 = vld [vmem:[#allocation4 + $0x330] sm:$0xff]
    %v288 = vld [vmem:[#allocation4 + $0x338] sm:$0xff]
    %v289 = vld [vmem:[#allocation4 + $0x340] sm:$0xff]
    %v290 = vld [vmem:[#allocation4 + $0x348] sm:$0xff]
    %v291 = vld [vmem:[#allocation4 + $0x350] sm:$0xff]
    %v292 = vld [vmem:[#allocation4 + $0x358] sm:$0xff]
    %v293 = vld [vmem:[#allocation4 + $0x360] sm:$0xff]
    %v294 = vld [vmem:[#allocation4 + $0x368] sm:$0xff]
    %v295 = vld [vmem:[#allocation4 + $0x370] sm:$0xff]
    %v296 = vld [vmem:[#allocation4 + $0x378] sm:$0xff]
    %v297 = vld [vmem:[#allocation4 + $0x380] sm:$0xff]
    %v298 = vld [vmem:[#allocation4 + $0x388] sm:$0xff]
    %v299 = vld [vmem:[#allocation4 + $0x390] sm:$0xff]
    %v300 = vld [vmem:[#allocation4 + $0x398] sm:$0xff]
    %v301 = vld [vmem:[#allocation4 + $0x3a0] sm:$0xff]
    %v302 = vld [vmem:[#allocation4 + $0x3a8] sm:$0xff]
    %v303 = vld [vmem:[#allocation4 + $0x3b0] sm:$0xff]
    %v304 = vld [vmem:[#allocation4 + $0x3b8] sm:$0xff]
    %v305 = vld [vmem:[#allocation4 + $0x3c0] sm:$0xff]
    %v306 = vld [vmem:[#allocation4 + $0x3c8] sm:$0xff]
    %v307 = vld [vmem:[#allocation4 + $0x3d0] sm:$0xff]
    %v308 = vld [vmem:[#allocation4 + $0x3d8] sm:$0xff]
    %v309 = vld [vmem:[#allocation4 + $0x3e0] sm:$0xff]
    %v310 = vld [vmem:[#allocation4 + $0x3e8] sm:$0xff]
    %v311 = vld [vmem:[#allocation4 + $0x3f0] sm:$0xff]
    %v312 = vld [vmem:[#allocation4 + $0x3f8] sm:$0xff]
    %v313 = vld [vmem:[#allocation4 + $0x400] sm:$0xff]
    %v314 = vld [vmem:[#allocation4 + $0x408] sm:$0xff]
    %v315 = vld [vmem:[#allocation4 + $0x410] sm:$0xff]
    %v316 = vld [vmem:[#allocation4 + $0x418] sm:$0xff]
    %v317 = vld [vmem:[#allocation4 + $0x420] sm:$0xff]
    %v318 = vld [vmem:[#allocation4 + $0x428] sm:$0xff]
    %v319 = vld [vmem:[#allocation4 + $0x430] sm:$0xff]
    %v320 = vld [vmem:[#allocation4 + $0x438] sm:$0xff]
    %v321 = vld [vmem:[#allocation4 + $0x440] sm:$0xff]
    %v322 = vld [vmem:[#allocation4 + $0x448] sm:$0xff]
    %v323 = vld [vmem:[#allocation4 + $0x450] sm:$0xff]
    %v324 = vld [vmem:[#allocation4 + $0x458] sm:$0xff]
    %v325 = vld [vmem:[#allocation4 + $0x460] sm:$0xff]
    %v326 = vld [vmem:[#allocation4 + $0x468] sm:$0xff]
    %v327 = vld [vmem:[#allocation4 + $0x470] sm:$0xff]
    %v328 = vld [vmem:[#allocation4 + $0x478] sm:$0xff]
    %v329 = vld [vmem:[#allocation4 + $0x480] sm:$0xff]
    %v330 = vld [vmem:[#allocation4 + $0x488] sm:$0xff]
    %v331 = vld [vmem:[#allocation4 + $0x490] sm:$0xff]
    %v332 = vld [vmem:[#allocation4 + $0x498] sm:$0xff]
    %v333 = vld [vmem:[#allocation4 + $0x4a0] sm:$0xff]
    %v334 = vld [vmem:[#allocation4 + $0x4a8] sm:$0xff]
    %v335 = vld [vmem:[#allocation4 + $0x4b0] sm:$0xff]
    %v336 = vld [vmem:[#allocation4 + $0x4b8] sm:$0xff]
    %v337 = vld [vmem:[#allocation4 + $0x4c0] sm:$0xff]
    %v338 = vld [vmem:[#allocation4 + $0x4c8] sm:$0xff]
    %v339 = vld [vmem:[#allocation4 + $0x4d0] sm:$0xff]
    %v340 = vld [vmem:[#allocation4 + $0x4d8] sm:$0xff]
    %v341 = vld [vmem:[#allocation4 + $0x4e0] sm:$0xff]
    %v342 = vld [vmem:[#allocation4 + $0x4e8] sm:$0xff]
    %v343 = vld [vmem:[#allocation4 + $0x4f0] sm:$0xff]
    %v344 = vld [vmem:[#allocation4 + $0x4f8] sm:$0xff]
    %v345 = vld [vmem:[#allocation4 + $0x500] sm:$0xff]
    %v346 = vld [vmem:[#allocation4 + $0x508] sm:$0xff]
    %v347 = vld [vmem:[#allocation4 + $0x510] sm:$0xff]
    %v348 = vld [vmem:[#allocation4 + $0x518] sm:$0xff]
    %v349 = vld [vmem:[#allocation4 + $0x520] sm:$0xff]
    %v350 = vld [vmem:[#allocation4 + $0x528] sm:$0xff]
    %v351 = vld [vmem:[#allocation4 + $0x530] sm:$0xff]
    %v352 = vld [vmem:[#allocation4 + $0x538] sm:$0xff]
    %v353 = vld [vmem:[#allocation4 + $0x540] sm:$0xff]
    %v354 = vld [vmem:[#allocation4 + $0x548] sm:$0xff]
    %v355 = vld [vmem:[#allocation4 + $0x550] sm:$0xff]
    %v356 = vld [vmem:[#allocation4 + $0x558] sm:$0xff]
    %v357 = vld [vmem:[#allocation4 + $0x560] sm:$0xff]
    %v358 = vld [vmem:[#allocation4 + $0x568] sm:$0xff]
    %v359 = vld [vmem:[#allocation4 + $0x570] sm:$0xff]
    %v360 = vld [vmem:[#allocation4 + $0x578] sm:$0xff]
    %v361 = vld [vmem:[#allocation4 + $0x580] sm:$0xff]
    %v362 = vld [vmem:[#allocation4 + $0x588] sm:$0xff]
    %v363 = vld [vmem:[#allocation4 + $0x590] sm:$0xff]
    %v364 = vld [vmem:[#allocation4 + $0x598] sm:$0xff]
    %v365 = vld [vmem:[#allocation4 + $0x5a0] sm:$0xff]
    %v366 = vld [vmem:[#allocation4 + $0x5a8] sm:$0xff]
    %v367 = vld [vmem:[#allocation4 + $0x5b0] sm:$0xff]
    %v368 = vld [vmem:[#allocation4 + $0x5b8] sm:$0xff]
    %v369 = vld [vmem:[#allocation4 + $0x5c0] sm:$0xff]
    %v370 = vld [vmem:[#allocation4 + $0x5c8] sm:$0xff]
    %v371 = vld [vmem:[#allocation4 + $0x5d0] sm:$0xff]
    %v372 = vld [vmem:[#allocation4 + $0x5d8] sm:$0xff]
    %v373 = vld [vmem:[#allocation4 + $0x5e0] sm:$0xff]
    %v374 = vld [vmem:[#allocation4 + $0x5e8] sm:$0xff]
    %v375 = vld [vmem:[#allocation4 + $0x5f0] sm:$0xff]
    %v376 = vld [vmem:[#allocation4 + $0x5f8] sm:$0xff]
    %v377 = vld [vmem:[%s3] sm:$0xf]
    %v379 = vlaneseq
    %v380 = vshrl.u32 %v379, 7
    %v381 = vsub.s32 0, %v380
    %v382 = vrot.slane %v377, %v381
    %v383 = vlaneseq
    %v384 = vshrl.u32 %v383, 7
    %v385 = vsub.s32 1, %v384
    %v386 = vrot.slane %v377, %v385
    %v387 = vlaneseq
    %v388 = vshrl.u32 %v387, 7
    %v389 = vsub.s32 2, %v388
    %v390 = vrot.slane %v377, %v389
    %v391 = vlaneseq
    %v392 = vshrl.u32 %v391, 7
    %v393 = vsub.s32 3, %v392
    %v394 = vrot.slane %v377, %v393
    %v411 = vunpack.c.l.b16 %v173
    %v412 = vunpack.c.h.b16 %v173
    %v413 = vunpack.c.l.b16 %v174
    %v414 = vunpack.c.h.b16 %v174
    %v415 = vunpack.c.l.b16 %v175
    %v416 = vunpack.c.h.b16 %v175
    %v417 = vunpack.c.l.b16 %v176
    %v418 = vunpack.c.h.b16 %v176
    %v419 = vunpack.c.l.b16 %v177
    %v420 = vunpack.c.h.b16 %v177
    %v421 = vunpack.c.l.b16 %v178
    %v422 = vunpack.c.h.b16 %v178
    %v423 = vunpack.c.l.b16 %v179
    %v424 = vunpack.c.h.b16 %v179
    %v425 = vunpack.c.l.b16 %v180
    %v426 = vunpack.c.h.b16 %v180
    %v427 = vunpack.c.l.b16 %v181
    %v428 = vunpack.c.h.b16 %v181
    %v429 = vunpack.c.l.b16 %v182
    %v430 = vunpack.c.h.b16 %v182
    %v431 = vunpack.c.l.b16 %v183
    %v432 = vunpack.c.h.b16 %v183
    %v433 = vunpack.c.l.b16 %v184
    %v434 = vunpack.c.h.b16 %v184
    %v435 = vpack.c.b16 %v417, %v411
    %v436 = vpack.c.b16 %v418, %v412
    %v437 = vpack.c.b16 %v419, %v413
    %v438 = vpack.c.b16 %v420, %v414
    %v439 = vpack.c.b16 %v421, %v415
    %v440 = vpack.c.b16 %v422, %v416
    %v441 = vpack.c.b16 %v429, %v423
    %v442 = vpack.c.b16 %v430, %v424
    %v443 = vpack.c.b16 %v431, %v425
    %v444 = vpack.c.b16 %v432, %v426
    %v445 = vpack.c.b16 %v433, %v427
    %v446 = vpack.c.b16 %v434, %v428
    %v651 = vunpack.c.l.b16 %v185
    %v652 = vunpack.c.h.b16 %v185
    %v653 = vunpack.c.l.b16 %v186
    %v654 = vunpack.c.h.b16 %v186
    %v655 = vunpack.c.l.b16 %v187
    %v656 = vunpack.c.h.b16 %v187
    %v657 = vunpack.c.l.b16 %v188
    %v658 = vunpack.c.h.b16 %v188
    %v659 = vunpack.c.l.b16 %v189
    %v660 = vunpack.c.h.b16 %v189
    %v661 = vunpack.c.l.b16 %v190
    %v662 = vunpack.c.h.b16 %v190
    %v663 = vunpack.c.l.b16 %v191
    %v664 = vunpack.c.h.b16 %v191
    %v665 = vunpack.c.l.b16 %v192
    %v666 = vunpack.c.h.b16 %v192
    %v667 = vunpack.c.l.b16 %v193
    %v668 = vunpack.c.h.b16 %v193
    %v669 = vunpack.c.l.b16 %v194
    %v670 = vunpack.c.h.b16 %v194
    %v671 = vunpack.c.l.b16 %v195
    %v672 = vunpack.c.h.b16 %v195
    %v673 = vunpack.c.l.b16 %v196
    %v674 = vunpack.c.h.b16 %v196
    %v675 = vunpack.c.l.b16 %v197
    %v676 = vunpack.c.h.b16 %v197
    %v677 = vunpack.c.l.b16 %v198
    %v678 = vunpack.c.h.b16 %v198
    %v679 = vunpack.c.l.b16 %v199
    %v680 = vunpack.c.h.b16 %v199
    %v681 = vunpack.c.l.b16 %v200
    %v682 = vunpack.c.h.b16 %v200
    %v683 = vunpack.c.l.b16 %v201
    %v684 = vunpack.c.h.b16 %v201
    %v685 = vunpack.c.l.b16 %v202
    %v686 = vunpack.c.h.b16 %v202
    %v687 = vunpack.c.l.b16 %v203
    %v688 = vunpack.c.h.b16 %v203
    %v689 = vunpack.c.l.b16 %v204
    %v690 = vunpack.c.h.b16 %v204
    %v691 = vunpack.c.l.b16 %v205
    %v692 = vunpack.c.h.b16 %v205
    %v693 = vunpack.c.l.b16 %v206
    %v694 = vunpack.c.h.b16 %v206
    %v695 = vunpack.c.l.b16 %v207
    %v696 = vunpack.c.h.b16 %v207
    %v697 = vunpack.c.l.b16 %v208
    %v698 = vunpack.c.h.b16 %v208
    %v699 = vunpack.c.l.b16 %v209
    %v700 = vunpack.c.h.b16 %v209
    %v701 = vunpack.c.l.b16 %v210
    %v702 = vunpack.c.h.b16 %v210
    %v703 = vunpack.c.l.b16 %v211
    %v704 = vunpack.c.h.b16 %v211
    %v705 = vunpack.c.l.b16 %v212
    %v706 = vunpack.c.h.b16 %v212
    %v707 = vunpack.c.l.b16 %v213
    %v708 = vunpack.c.h.b16 %v213
    %v709 = vunpack.c.l.b16 %v214
    %v710 = vunpack.c.h.b16 %v214
    %v711 = vunpack.c.l.b16 %v215
    %v712 = vunpack.c.h.b16 %v215
    %v713 = vunpack.c.l.b16 %v216
    %v714 = vunpack.c.h.b16 %v216
    %v715 = vunpack.c.l.b16 %v217
    %v716 = vunpack.c.h.b16 %v217
    %v717 = vunpack.c.l.b16 %v218
    %v718 = vunpack.c.h.b16 %v218
    %v719 = vunpack.c.l.b16 %v219
    %v720 = vunpack.c.h.b16 %v219
    %v721 = vunpack.c.l.b16 %v220
    %v722 = vunpack.c.h.b16 %v220
    %v723 = vunpack.c.l.b16 %v221
    %v724 = vunpack.c.h.b16 %v221
    %v725 = vunpack.c.l.b16 %v222
    %v726 = vunpack.c.h.b16 %v222
    %v727 = vunpack.c.l.b16 %v223
    %v728 = vunpack.c.h.b16 %v223
    %v729 = vunpack.c.l.b16 %v224
    %v730 = vunpack.c.h.b16 %v224
    %v731 = vunpack.c.l.b16 %v225
    %v732 = vunpack.c.h.b16 %v225
    %v733 = vunpack.c.l.b16 %v226
    %v734 = vunpack.c.h.b16 %v226
    %v735 = vunpack.c.l.b16 %v227
    %v736 = vunpack.c.h.b16 %v227
    %v737 = vunpack.c.l.b16 %v228
    %v738 = vunpack.c.h.b16 %v228
    %v739 = vunpack.c.l.b16 %v229
    %v740 = vunpack.c.h.b16 %v229
    %v741 = vunpack.c.l.b16 %v230
    %v742 = vunpack.c.h.b16 %v230
    %v743 = vunpack.c.l.b16 %v231
    %v744 = vunpack.c.h.b16 %v231
    %v745 = vunpack.c.l.b16 %v232
    %v746 = vunpack.c.h.b16 %v232
    %v747 = vunpack.c.l.b16 %v233
    %v748 = vunpack.c.h.b16 %v233
    %v749 = vunpack.c.l.b16 %v234
    %v750 = vunpack.c.h.b16 %v234
    %v751 = vunpack.c.l.b16 %v235
    %v752 = vunpack.c.h.b16 %v235
    %v753 = vunpack.c.l.b16 %v236
    %v754 = vunpack.c.h.b16 %v236
    %v755 = vunpack.c.l.b16 %v237
    %v756 = vunpack.c.h.b16 %v237
    %v757 = vunpack.c.l.b16 %v238
    %v758 = vunpack.c.h.b16 %v238
    %v759 = vunpack.c.l.b16 %v239
    %v760 = vunpack.c.h.b16 %v239
    %v761 = vunpack.c.l.b16 %v240
    %v762 = vunpack.c.h.b16 %v240
    %v763 = vunpack.c.l.b16 %v241
    %v764 = vunpack.c.h.b16 %v241
    %v765 = vunpack.c.l.b16 %v242
    %v766 = vunpack.c.h.b16 %v242
    %v767 = vunpack.c.l.b16 %v243
    %v768 = vunpack.c.h.b16 %v243
    %v769 = vunpack.c.l.b16 %v244
    %v770 = vunpack.c.h.b16 %v244
    %v771 = vunpack.c.l.b16 %v245
    %v772 = vunpack.c.h.b16 %v245
    %v773 = vunpack.c.l.b16 %v246
    %v774 = vunpack.c.h.b16 %v246
    %v775 = vunpack.c.l.b16 %v247
    %v776 = vunpack.c.h.b16 %v247
    %v777 = vunpack.c.l.b16 %v248
    %v778 = vunpack.c.h.b16 %v248
    %v779 = vunpack.c.l.b16 %v249
    %v780 = vunpack.c.h.b16 %v249
    %v781 = vunpack.c.l.b16 %v250
    %v782 = vunpack.c.h.b16 %v250
    %v783 = vunpack.c.l.b16 %v251
    %v784 = vunpack.c.h.b16 %v251
    %v785 = vunpack.c.l.b16 %v252
    %v786 = vunpack.c.h.b16 %v252
    %v787 = vunpack.c.l.b16 %v253
    %v788 = vunpack.c.h.b16 %v253
    %v789 = vunpack.c.l.b16 %v254
    %v790 = vunpack.c.h.b16 %v254
    %v791 = vunpack.c.l.b16 %v255
    %v792 = vunpack.c.h.b16 %v255
    %v793 = vunpack.c.l.b16 %v256
    %v794 = vunpack.c.h.b16 %v256
    %v795 = vunpack.c.l.b16 %v257
    %v796 = vunpack.c.h.b16 %v257
    %v797 = vunpack.c.l.b16 %v258
    %v798 = vunpack.c.h.b16 %v258
    %v799 = vunpack.c.l.b16 %v259
    %v800 = vunpack.c.h.b16 %v259
    %v801 = vunpack.c.l.b16 %v260
    %v802 = vunpack.c.h.b16 %v260
    %v803 = vunpack.c.l.b16 %v261
    %v804 = vunpack.c.h.b16 %v261
    %v805 = vunpack.c.l.b16 %v262
    %v806 = vunpack.c.h.b16 %v262
    %v807 = vunpack.c.l.b16 %v263
    %v808 = vunpack.c.h.b16 %v263
    %v809 = vunpack.c.l.b16 %v264
    %v810 = vunpack.c.h.b16 %v264
    %v811 = vunpack.c.l.b16 %v265
    %v812 = vunpack.c.h.b16 %v265
    %v813 = vunpack.c.l.b16 %v266
    %v814 = vunpack.c.h.b16 %v266
    %v815 = vunpack.c.l.b16 %v267
    %v816 = vunpack.c.h.b16 %v267
    %v817 = vunpack.c.l.b16 %v268
    %v818 = vunpack.c.h.b16 %v268
    %v819 = vunpack.c.l.b16 %v269
    %v820 = vunpack.c.h.b16 %v269
    %v821 = vunpack.c.l.b16 %v270
    %v822 = vunpack.c.h.b16 %v270
    %v823 = vunpack.c.l.b16 %v271
    %v824 = vunpack.c.h.b16 %v271
    %v825 = vunpack.c.l.b16 %v272
    %v826 = vunpack.c.h.b16 %v272
    %v827 = vunpack.c.l.b16 %v273
    %v828 = vunpack.c.h.b16 %v273
    %v829 = vunpack.c.l.b16 %v274
    %v830 = vunpack.c.h.b16 %v274
    %v831 = vunpack.c.l.b16 %v275
    %v832 = vunpack.c.h.b16 %v275
    %v833 = vunpack.c.l.b16 %v276
    %v834 = vunpack.c.h.b16 %v276
    %v835 = vunpack.c.l.b16 %v277
    %v836 = vunpack.c.h.b16 %v277
    %v837 = vunpack.c.l.b16 %v278
    %v838 = vunpack.c.h.b16 %v278
    %v839 = vunpack.c.l.b16 %v279
    %v840 = vunpack.c.h.b16 %v279
    %v841 = vunpack.c.l.b16 %v280
    %v842 = vunpack.c.h.b16 %v280
    %v843 = vunpack.c.l.b16 %v281
    %v844 = vunpack.c.h.b16 %v281
    %v845 = vunpack.c.l.b16 %v282
    %v846 = vunpack.c.h.b16 %v282
    %v847 = vunpack.c.l.b16 %v283
    %v848 = vunpack.c.h.b16 %v283
    %v849 = vunpack.c.l.b16 %v284
    %v850 = vunpack.c.h.b16 %v284
    %v851 = vunpack.c.l.b16 %v285
    %v852 = vunpack.c.h.b16 %v285
    %v853 = vunpack.c.l.b16 %v286
    %v854 = vunpack.c.h.b16 %v286
    %v855 = vunpack.c.l.b16 %v287
    %v856 = vunpack.c.h.b16 %v287
    %v857 = vunpack.c.l.b16 %v288
    %v858 = vunpack.c.h.b16 %v288
    %v859 = vunpack.c.l.b16 %v289
    %v860 = vunpack.c.h.b16 %v289
    %v861 = vunpack.c.l.b16 %v290
    %v862 = vunpack.c.h.b16 %v290
    %v863 = vunpack.c.l.b16 %v291
    %v864 = vunpack.c.h.b16 %v291
    %v865 = vunpack.c.l.b16 %v292
    %v866 = vunpack.c.h.b16 %v292
    %v867 = vunpack.c.l.b16 %v293
    %v868 = vunpack.c.h.b16 %v293
    %v869 = vunpack.c.l.b16 %v294
    %v870 = vunpack.c.h.b16 %v294
    %v871 = vunpack.c.l.b16 %v295
    %v872 = vunpack.c.h.b16 %v295
    %v873 = vunpack.c.l.b16 %v296
    %v874 = vunpack.c.h.b16 %v296
    %v875 = vunpack.c.l.b16 %v297
    %v876 = vunpack.c.h.b16 %v297
    %v877 = vunpack.c.l.b16 %v298
    %v878 = vunpack.c.h.b16 %v298
    %v879 = vunpack.c.l.b16 %v299
    %v880 = vunpack.c.h.b16 %v299
    %v881 = vunpack.c.l.b16 %v300
    %v882 = vunpack.c.h.b16 %v300
    %v883 = vunpack.c.l.b16 %v301
    %v884 = vunpack.c.h.b16 %v301
    %v885 = vunpack.c.l.b16 %v302
    %v886 = vunpack.c.h.b16 %v302
    %v887 = vunpack.c.l.b16 %v303
    %v888 = vunpack.c.h.b16 %v303
    %v889 = vunpack.c.l.b16 %v304
    %v890 = vunpack.c.h.b16 %v304
    %v891 = vunpack.c.l.b16 %v305
    %v892 = vunpack.c.h.b16 %v305
    %v893 = vunpack.c.l.b16 %v306
    %v894 = vunpack.c.h.b16 %v306
    %v895 = vunpack.c.l.b16 %v307
    %v896 = vunpack.c.h.b16 %v307
    %v897 = vunpack.c.l.b16 %v308
    %v898 = vunpack.c.h.b16 %v308
    %v899 = vunpack.c.l.b16 %v309
    %v900 = vunpack.c.h.b16 %v309
    %v901 = vunpack.c.l.b16 %v310
    %v902 = vunpack.c.h.b16 %v310
    %v903 = vunpack.c.l.b16 %v311
    %v904 = vunpack.c.h.b16 %v311
    %v905 = vunpack.c.l.b16 %v312
    %v906 = vunpack.c.h.b16 %v312
    %v907 = vunpack.c.l.b16 %v313
    %v908 = vunpack.c.h.b16 %v313
    %v909 = vunpack.c.l.b16 %v314
    %v910 = vunpack.c.h.b16 %v314
    %v911 = vunpack.c.l.b16 %v315
    %v912 = vunpack.c.h.b16 %v315
    %v913 = vunpack.c.l.b16 %v316
    %v914 = vunpack.c.h.b16 %v316
    %v915 = vunpack.c.l.b16 %v317
    %v916 = vunpack.c.h.b16 %v317
    %v917 = vunpack.c.l.b16 %v318
    %v918 = vunpack.c.h.b16 %v318
    %v919 = vunpack.c.l.b16 %v319
    %v920 = vunpack.c.h.b16 %v319
    %v921 = vunpack.c.l.b16 %v320
    %v922 = vunpack.c.h.b16 %v320
    %v923 = vunpack.c.l.b16 %v321
    %v924 = vunpack.c.h.b16 %v321
    %v925 = vunpack.c.l.b16 %v322
    %v926 = vunpack.c.h.b16 %v322
    %v927 = vunpack.c.l.b16 %v323
    %v928 = vunpack.c.h.b16 %v323
    %v929 = vunpack.c.l.b16 %v324
    %v930 = vunpack.c.h.b16 %v324
    %v931 = vunpack.c.l.b16 %v325
    %v932 = vunpack.c.h.b16 %v325
    %v933 = vunpack.c.l.b16 %v326
    %v934 = vunpack.c.h.b16 %v326
    %v935 = vunpack.c.l.b16 %v327
    %v936 = vunpack.c.h.b16 %v327
    %v937 = vunpack.c.l.b16 %v328
    %v938 = vunpack.c.h.b16 %v328
    %v939 = vunpack.c.l.b16 %v329
    %v940 = vunpack.c.h.b16 %v329
    %v941 = vunpack.c.l.b16 %v330
    %v942 = vunpack.c.h.b16 %v330
    %v943 = vunpack.c.l.b16 %v331
    %v944 = vunpack.c.h.b16 %v331
    %v945 = vunpack.c.l.b16 %v332
    %v946 = vunpack.c.h.b16 %v332
    %v947 = vunpack.c.l.b16 %v333
    %v948 = vunpack.c.h.b16 %v333
    %v949 = vunpack.c.l.b16 %v334
    %v950 = vunpack.c.h.b16 %v334
    %v951 = vunpack.c.l.b16 %v335
    %v952 = vunpack.c.h.b16 %v335
    %v953 = vunpack.c.l.b16 %v336
    %v954 = vunpack.c.h.b16 %v336
    %v955 = vunpack.c.l.b16 %v337
    %v956 = vunpack.c.h.b16 %v337
    %v957 = vunpack.c.l.b16 %v338
    %v958 = vunpack.c.h.b16 %v338
    %v959 = vunpack.c.l.b16 %v339
    %v960 = vunpack.c.h.b16 %v339
    %v961 = vunpack.c.l.b16 %v340
    %v962 = vunpack.c.h.b16 %v340
    %v963 = vunpack.c.l.b16 %v341
    %v964 = vunpack.c.h.b16 %v341
    %v965 = vunpack.c.l.b16 %v342
    %v966 = vunpack.c.h.b16 %v342
    %v967 = vunpack.c.l.b16 %v343
    %v968 = vunpack.c.h.b16 %v343
    %v969 = vunpack.c.l.b16 %v344
    %v970 = vunpack.c.h.b16 %v344
    %v971 = vunpack.c.l.b16 %v345
    %v972 = vunpack.c.h.b16 %v345
    %v973 = vunpack.c.l.b16 %v346
    %v974 = vunpack.c.h.b16 %v346
    %v975 = vunpack.c.l.b16 %v347
    %v976 = vunpack.c.h.b16 %v347
    %v977 = vunpack.c.l.b16 %v348
    %v978 = vunpack.c.h.b16 %v348
    %v979 = vunpack.c.l.b16 %v349
    %v980 = vunpack.c.h.b16 %v349
    %v981 = vunpack.c.l.b16 %v350
    %v982 = vunpack.c.h.b16 %v350
    %v983 = vunpack.c.l.b16 %v351
    %v984 = vunpack.c.h.b16 %v351
    %v985 = vunpack.c.l.b16 %v352
    %v986 = vunpack.c.h.b16 %v352
    %v987 = vunpack.c.l.b16 %v353
    %v988 = vunpack.c.h.b16 %v353
    %v989 = vunpack.c.l.b16 %v354
    %v990 = vunpack.c.h.b16 %v354
    %v991 = vunpack.c.l.b16 %v355
    %v992 = vunpack.c.h.b16 %v355
    %v993 = vunpack.c.l.b16 %v356
    %v994 = vunpack.c.h.b16 %v356
    %v995 = vunpack.c.l.b16 %v357
    %v996 = vunpack.c.h.b16 %v357
    %v997 = vunpack.c.l.b16 %v358
    %v998 = vunpack.c.h.b16 %v358
    %v999 = vunpack.c.l.b16 %v359
    %v1000 = vunpack.c.h.b16 %v359
    %v1001 = vunpack.c.l.b16 %v360
    %v1002 = vunpack.c.h.b16 %v360
    %v1003 = vunpack.c.l.b16 %v361
    %v1004 = vunpack.c.h.b16 %v361
    %v1005 = vunpack.c.l.b16 %v362
    %v1006 = vunpack.c.h.b16 %v362
    %v1007 = vunpack.c.l.b16 %v363
    %v1008 = vunpack.c.h.b16 %v363
    %v1009 = vunpack.c.l.b16 %v364
    %v1010 = vunpack.c.h.b16 %v364
    %v1011 = vunpack.c.l.b16 %v365
    %v1012 = vunpack.c.h.b16 %v365
    %v1013 = vunpack.c.l.b16 %v366
    %v1014 = vunpack.c.h.b16 %v366
    %v1015 = vunpack.c.l.b16 %v367
    %v1016 = vunpack.c.h.b16 %v367
    %v1017 = vunpack.c.l.b16 %v368
    %v1018 = vunpack.c.h.b16 %v368
    %v1019 = vunpack.c.l.b16 %v369
    %v1020 = vunpack.c.h.b16 %v369
    %v1021 = vunpack.c.l.b16 %v370
    %v1022 = vunpack.c.h.b16 %v370
    %v1023 = vunpack.c.l.b16 %v371
    %v1024 = vunpack.c.h.b16 %v371
    %v1025 = vunpack.c.l.b16 %v372
    %v1026 = vunpack.c.h.b16 %v372
    %v1027 = vunpack.c.l.b16 %v373
    %v1028 = vunpack.c.h.b16 %v373
    %v1029 = vunpack.c.l.b16 %v374
    %v1030 = vunpack.c.h.b16 %v374
    %v1031 = vunpack.c.l.b16 %v375
    %v1032 = vunpack.c.h.b16 %v375
    %v1033 = vunpack.c.l.b16 %v376
    %v1034 = vunpack.c.h.b16 %v376
    %v1035 = vpack.c.b16 %v655, %v651
    %v1036 = vpack.c.b16 %v656, %v652
    %v1037 = vpack.c.b16 %v657, %v653
    %v1038 = vpack.c.b16 %v658, %v654
    %v1039 = vpack.c.b16 %v663, %v659
    %v1040 = vpack.c.b16 %v664, %v660
    %v1041 = vpack.c.b16 %v665, %v661
    %v1042 = vpack.c.b16 %v666, %v662
    %v1043 = vpack.c.b16 %v671, %v667
    %v1044 = vpack.c.b16 %v672, %v668
    %v1045 = vpack.c.b16 %v673, %v669
    %v1046 = vpack.c.b16 %v674, %v670
    %v1047 = vpack.c.b16 %v679, %v675
    %v1048 = vpack.c.b16 %v680, %v676
    %v1049 = vpack.c.b16 %v681, %v677
    %v1050 = vpack.c.b16 %v682, %v678
    %v1051 = vpack.c.b16 %v687, %v683
    %v1052 = vpack.c.b16 %v688, %v684
    %v1053 = vpack.c.b16 %v689, %v685
    %v1054 = vpack.c.b16 %v690, %v686
    %v1055 = vpack.c.b16 %v695, %v691
    %v1056 = vpack.c.b16 %v696, %v692
    %v1057 = vpack.c.b16 %v697, %v693
    %v1058 = vpack.c.b16 %v698, %v694
    %v1059 = vpack.c.b16 %v703, %v699
    %v1060 = vpack.c.b16 %v704, %v700
    %v1061 = vpack.c.b16 %v705, %v701
    %v1062 = vpack.c.b16 %v706, %v702
    %v1063 = vpack.c.b16 %v711, %v707
    %v1064 = vpack.c.b16 %v712, %v708
    %v1065 = vpack.c.b16 %v713, %v709
    %v1066 = vpack.c.b16 %v714, %v710
    %v1067 = vpack.c.b16 %v719, %v715
    %v1068 = vpack.c.b16 %v720, %v716
    %v1069 = vpack.c.b16 %v721, %v717
    %v1070 = vpack.c.b16 %v722, %v718
    %v1071 = vpack.c.b16 %v727, %v723
    %v1072 = vpack.c.b16 %v728, %v724
    %v1073 = vpack.c.b16 %v729, %v725
    %v1074 = vpack.c.b16 %v730, %v726
    %v1075 = vpack.c.b16 %v735, %v731
    %v1076 = vpack.c.b16 %v736, %v732
    %v1077 = vpack.c.b16 %v737, %v733
    %v1078 = vpack.c.b16 %v738, %v734
    %v1079 = vpack.c.b16 %v743, %v739
    %v1080 = vpack.c.b16 %v744, %v740
    %v1081 = vpack.c.b16 %v745, %v741
    %v1082 = vpack.c.b16 %v746, %v742
    %v1083 = vpack.c.b16 %v751, %v747
    %v1084 = vpack.c.b16 %v752, %v748
    %v1085 = vpack.c.b16 %v753, %v749
    %v1086 = vpack.c.b16 %v754, %v750
    %v1087 = vpack.c.b16 %v759, %v755
    %v1088 = vpack.c.b16 %v760, %v756
    %v1089 = vpack.c.b16 %v761, %v757
    %v1090 = vpack.c.b16 %v762, %v758
    %v1091 = vpack.c.b16 %v767, %v763
    %v1092 = vpack.c.b16 %v768, %v764
    %v1093 = vpack.c.b16 %v769, %v765
    %v1094 = vpack.c.b16 %v770, %v766
    %v1095 = vpack.c.b16 %v775, %v771
    %v1096 = vpack.c.b16 %v776, %v772
    %v1097 = vpack.c.b16 %v777, %v773
    %v1098 = vpack.c.b16 %v778, %v774
    %v1099 = vpack.c.b16 %v783, %v779
    %v1100 = vpack.c.b16 %v784, %v780
    %v1101 = vpack.c.b16 %v785, %v781
    %v1102 = vpack.c.b16 %v786, %v782
    %v1103 = vpack.c.b16 %v791, %v787
    %v1104 = vpack.c.b16 %v792, %v788
    %v1105 = vpack.c.b16 %v793, %v789
    %v1106 = vpack.c.b16 %v794, %v790
    %v1107 = vpack.c.b16 %v799, %v795
    %v1108 = vpack.c.b16 %v800, %v796
    %v1109 = vpack.c.b16 %v801, %v797
    %v1110 = vpack.c.b16 %v802, %v798
    %v1111 = vpack.c.b16 %v807, %v803
    %v1112 = vpack.c.b16 %v808, %v804
    %v1113 = vpack.c.b16 %v809, %v805
    %v1114 = vpack.c.b16 %v810, %v806
    %v1115 = vpack.c.b16 %v815, %v811
    %v1116 = vpack.c.b16 %v816, %v812
    %v1117 = vpack.c.b16 %v817, %v813
    %v1118 = vpack.c.b16 %v818, %v814
    %v1119 = vpack.c.b16 %v823, %v819
    %v1120 = vpack.c.b16 %v824, %v820
    %v1121 = vpack.c.b16 %v825, %v821
    %v1122 = vpack.c.b16 %v826, %v822
    %v1123 = vpack.c.b16 %v831, %v827
    %v1124 = vpack.c.b16 %v832, %v828
    %v1125 = vpack.c.b16 %v833, %v829
    %v1126 = vpack.c.b16 %v834, %v830
    %v1127 = vpack.c.b16 %v839, %v835
    %v1128 = vpack.c.b16 %v840, %v836
    %v1129 = vpack.c.b16 %v841, %v837
    %v1130 = vpack.c.b16 %v842, %v838
    %v1131 = vpack.c.b16 %v847, %v843
    %v1132 = vpack.c.b16 %v848, %v844
    %v1133 = vpack.c.b16 %v849, %v845
    %v1134 = vpack.c.b16 %v850, %v846
    %v1135 = vpack.c.b16 %v855, %v851
    %v1136 = vpack.c.b16 %v856, %v852
    %v1137 = vpack.c.b16 %v857, %v853
    %v1138 = vpack.c.b16 %v858, %v854
    %v1139 = vpack.c.b16 %v863, %v859
    %v1140 = vpack.c.b16 %v864, %v860
    %v1141 = vpack.c.b16 %v865, %v861
    %v1142 = vpack.c.b16 %v866, %v862
    %v1143 = vpack.c.b16 %v871, %v867
    %v1144 = vpack.c.b16 %v872, %v868
    %v1145 = vpack.c.b16 %v873, %v869
    %v1146 = vpack.c.b16 %v874, %v870
    %v1147 = vpack.c.b16 %v879, %v875
    %v1148 = vpack.c.b16 %v880, %v876
    %v1149 = vpack.c.b16 %v881, %v877
    %v1150 = vpack.c.b16 %v882, %v878
    %v1151 = vpack.c.b16 %v887, %v883
    %v1152 = vpack.c.b16 %v888, %v884
    %v1153 = vpack.c.b16 %v889, %v885
    %v1154 = vpack.c.b16 %v890, %v886
    %v1155 = vpack.c.b16 %v895, %v891
    %v1156 = vpack.c.b16 %v896, %v892
    %v1157 = vpack.c.b16 %v897, %v893
    %v1158 = vpack.c.b16 %v898, %v894
    %v1159 = vpack.c.b16 %v903, %v899
    %v1160 = vpack.c.b16 %v904, %v900
    %v1161 = vpack.c.b16 %v905, %v901
    %v1162 = vpack.c.b16 %v906, %v902
    %v1163 = vpack.c.b16 %v911, %v907
    %v1164 = vpack.c.b16 %v912, %v908
    %v1165 = vpack.c.b16 %v913, %v909
    %v1166 = vpack.c.b16 %v914, %v910
    %v1167 = vpack.c.b16 %v919, %v915
    %v1168 = vpack.c.b16 %v920, %v916
    %v1169 = vpack.c.b16 %v921, %v917
    %v1170 = vpack.c.b16 %v922, %v918
    %v1171 = vpack.c.b16 %v927, %v923
    %v1172 = vpack.c.b16 %v928, %v924
    %v1173 = vpack.c.b16 %v929, %v925
    %v1174 = vpack.c.b16 %v930, %v926
    %v1175 = vpack.c.b16 %v935, %v931
    %v1176 = vpack.c.b16 %v936, %v932
    %v1177 = vpack.c.b16 %v937, %v933
    %v1178 = vpack.c.b16 %v938, %v934
    %v1179 = vpack.c.b16 %v943, %v939
    %v1180 = vpack.c.b16 %v944, %v940
    %v1181 = vpack.c.b16 %v945, %v941
    %v1182 = vpack.c.b16 %v946, %v942
    %v1183 = vpack.c.b16 %v951, %v947
    %v1184 = vpack.c.b16 %v952, %v948
    %v1185 = vpack.c.b16 %v953, %v949
    %v1186 = vpack.c.b16 %v954, %v950
    %v1187 = vpack.c.b16 %v959, %v955
    %v1188 = vpack.c.b16 %v960, %v956
    %v1189 = vpack.c.b16 %v961, %v957
    %v1190 = vpack.c.b16 %v962, %v958
    %v1191 = vpack.c.b16 %v967, %v963
    %v1192 = vpack.c.b16 %v968, %v964
    %v1193 = vpack.c.b16 %v969, %v965
    %v1194 = vpack.c.b16 %v970, %v966
    %v1195 = vpack.c.b16 %v975, %v971
    %v1196 = vpack.c.b16 %v976, %v972
    %v1197 = vpack.c.b16 %v977, %v973
    %v1198 = vpack.c.b16 %v978, %v974
    %v1199 = vpack.c.b16 %v983, %v979
    %v1200 = vpack.c.b16 %v984, %v980
    %v1201 = vpack.c.b16 %v985, %v981
    %v1202 = vpack.c.b16 %v986, %v982
    %v1203 = vpack.c.b16 %v991, %v987
    %v1204 = vpack.c.b16 %v992, %v988
    %v1205 = vpack.c.b16 %v993, %v989
    %v1206 = vpack.c.b16 %v994, %v990
    %v1207 = vpack.c.b16 %v999, %v995
    %v1208 = vpack.c.b16 %v1000, %v996
    %v1209 = vpack.c.b16 %v1001, %v997
    %v1210 = vpack.c.b16 %v1002, %v998
    %v1211 = vpack.c.b16 %v1007, %v1003
    %v1212 = vpack.c.b16 %v1008, %v1004
    %v1213 = vpack.c.b16 %v1009, %v1005
    %v1214 = vpack.c.b16 %v1010, %v1006
    %v1215 = vpack.c.b16 %v1015, %v1011
    %v1216 = vpack.c.b16 %v1016, %v1012
    %v1217 = vpack.c.b16 %v1017, %v1013
    %v1218 = vpack.c.b16 %v1018, %v1014
    %v1219 = vpack.c.b16 %v1023, %v1019
    %v1220 = vpack.c.b16 %v1024, %v1020
    %v1221 = vpack.c.b16 %v1025, %v1021
    %v1222 = vpack.c.b16 %v1026, %v1022
    %v1223 = vpack.c.b16 %v1031, %v1027
    %v1224 = vpack.c.b16 %v1032, %v1028
    %v1225 = vpack.c.b16 %v1033, %v1029
    %v1226 = vpack.c.b16 %v1034, %v1030
    %1419 = vmatprep.subr.bf16.mxu0 %v1064
    %1420 = vmatpush1.bf16.msra.mxu0 %v1063
    %1421 = vmatprep.subr.bf16.mxu0 %v1060
    %1422 = vmatpush1.bf16.msra.mxu0 %v1059
    %1423 = vmatprep.subr.bf16.mxu0 %v1056
    %1424 = vmatpush1.bf16.msra.mxu0 %v1055
    %1425 = vmatprep.subr.bf16.mxu0 %v1052
    %1426 = vmatpush1.bf16.msra.mxu0 %v1051
    %1427 = vmatprep.subr.bf16.mxu0 %v1048
    %1428 = vmatpush1.bf16.msra.mxu0 %v1047
    %1429 = vmatprep.subr.bf16.mxu0 %v1044
    %1430 = vmatpush1.bf16.msra.mxu0 %v1043
    %1431 = vmatprep.subr.bf16.mxu0 %v1040
    %1432 = vmatpush1.bf16.msra.mxu0 %v1039
    %1433 = vmatprep.subr.bf16.mxu0 %v1036
    %1434 = vmatpush1.bf16.msra.mxu0 %v1035
    %1435 = vmatprep.subr.bf16.mxu0 %v1096
    %1436 = vmatpush2.bf16.msra.mxu0 %v1095
    %1437 = vmatprep.subr.bf16.mxu0 %v1092
    %1438 = vmatpush2.bf16.msra.mxu0 %v1091
    %1439 = vmatprep.subr.bf16.mxu0 %v1088
    %1440 = vmatpush2.bf16.msra.mxu0 %v1087
    %1441 = vmatprep.subr.bf16.mxu0 %v1084
    %1442 = vmatpush2.bf16.msra.mxu0 %v1083
    %1443 = vmatprep.subr.bf16.mxu0 %v1080
    %1444 = vmatpush2.bf16.msra.mxu0 %v1079
    %1445 = vmatprep.subr.bf16.mxu0 %v1076
    %1446 = vmatpush2.bf16.msra.mxu0 %v1075
    %1447 = vmatprep.subr.bf16.mxu0 %v1072
    %1448 = vmatpush2.bf16.msra.mxu0 %v1071
    %1449 = vmatprep.subr.bf16.mxu0 %v1068
    %1450 = vmatpush2.bf16.msra.mxu0 %v1067
    %1451 = vmatprep.mubr.bf16.mxu0 %v436
    %1452 = vmatmul.mubr.bf16.gmra.mxu0 %v435
    %v1453 = vpop.f32.mrf.mxu0
    %v1454 = vadd.f32 %v382, %v1453
    %v1455 = vpop.f32.mrf.mxu0
    %v1456 = vadd.f32 %v386, %v1455
    %v1457 = vpop.f32.mrf.mxu0
    %v1458 = vadd.f32 %v382, %v1457
    %v1459 = vpop.f32.mrf.mxu0
    %v1460 = vadd.f32 %v386, %v1459
    %1461 = vmatprep.mubr.bf16.mxu0 %v442
    %1462 = vmatmul.mubr.bf16.gmra.mxu0 %v441
    %v1463 = vpop.f32.mrf.mxu0
    %v1464 = vadd.f32 %v382, %v1463
    %v1465 = vpop.f32.mrf.mxu0
    %v1466 = vadd.f32 %v386, %v1465
    %v1467 = vpop.f32.mrf.mxu0
    %v1468 = vadd.f32 %v382, %v1467
    %v1469 = vpop.f32.mrf.mxu0
    %v1470 = vadd.f32 %v386, %v1469
    %1471 = vdwg.mxu0
    %1472 = vmatprep.subr.bf16.mxu0 %v1128
    %1473 = vmatpush1.bf16.msra.mxu0 %v1127
    %1474 = vmatprep.subr.bf16.mxu0 %v1124
    %1475 = vmatpush1.bf16.msra.mxu0 %v1123
    %1476 = vmatprep.subr.bf16.mxu0 %v1120
    %1477 = vmatpush1.bf16.msra.mxu0 %v1119
    %1478 = vmatprep.subr.bf16.mxu0 %v1116
    %1479 = vmatpush1.bf16.msra.mxu0 %v1115
    %1480 = vmatprep.subr.bf16.mxu0 %v1112
    %1481 = vmatpush1.bf16.msra.mxu0 %v1111
    %1482 = vmatprep.subr.bf16.mxu0 %v1108
    %1483 = vmatpush1.bf16.msra.mxu0 %v1107
    %1484 = vmatprep.subr.bf16.mxu0 %v1104
    %1485 = vmatpush1.bf16.msra.mxu0 %v1103
    %1486 = vmatprep.subr.bf16.mxu0 %v1100
    %1487 = vmatpush1.bf16.msra.mxu0 %v1099
    %1488 = vmatprep.subr.bf16.mxu0 %v1160
    %1489 = vmatpush2.bf16.msra.mxu0 %v1159
    %1490 = vmatprep.subr.bf16.mxu0 %v1156
    %1491 = vmatpush2.bf16.msra.mxu0 %v1155
    %1492 = vmatprep.subr.bf16.mxu0 %v1152
    %1493 = vmatpush2.bf16.msra.mxu0 %v1151
    %1494 = vmatprep.subr.bf16.mxu0 %v1148
    %1495 = vmatpush2.bf16.msra.mxu0 %v1147
    %1496 = vmatprep.subr.bf16.mxu0 %v1144
    %1497 = vmatpush2.bf16.msra.mxu0 %v1143
    %1498 = vmatprep.subr.bf16.mxu0 %v1140
    %1499 = vmatpush2.bf16.msra.mxu0 %v1139
    %1500 = vmatprep.subr.bf16.mxu0 %v1136
    %1501 = vmatpush2.bf16.msra.mxu0 %v1135
    %1502 = vmatprep.subr.bf16.mxu0 %v1132
    %1503 = vmatpush2.bf16.msra.mxu0 %v1131
    %1504 = vmatprep.mubr.bf16.mxu0 %v438
    %1505 = vmatmul.mubr.bf16.gmra.mxu0 %v437
    %v1506 = vpop.f32.mrf.mxu0
    %v1507 = vadd.f32 %v1454, %v1506
    %v1508 = vpop.f32.mrf.mxu0
    %v1509 = vadd.f32 %v1456, %v1508
    %v1510 = vpop.f32.mrf.mxu0
    %v1511 = vadd.f32 %v1458, %v1510
    %v1512 = vpop.f32.mrf.mxu0
    %v1513 = vadd.f32 %v1460, %v1512
    %1514 = vmatprep.mubr.bf16.mxu0 %v444
    %1515 = vmatmul.mubr.bf16.gmra.mxu0 %v443
    %v1516 = vpop.f32.mrf.mxu0
    %v1517 = vadd.f32 %v1464, %v1516
    %v1518 = vpop.f32.mrf.mxu0
    %v1519 = vadd.f32 %v1466, %v1518
    %v1520 = vpop.f32.mrf.mxu0
    %v1521 = vadd.f32 %v1468, %v1520
    %v1522 = vpop.f32.mrf.mxu0
    %v1523 = vadd.f32 %v1470, %v1522
    %1524 = vdwg.mxu0
    %1525 = vmatprep.subr.bf16.mxu0 %v1192
    %1526 = vmatpush1.bf16.msra.mxu0 %v1191
    %1527 = vmatprep.subr.bf16.mxu0 %v1188
    %1528 = vmatpush1.bf16.msra.mxu0 %v1187
    %1529 = vmatprep.subr.bf16.mxu0 %v1184
    %1530 = vmatpush1.bf16.msra.mxu0 %v1183
    %1531 = vmatprep.subr.bf16.mxu0 %v1180
    %1532 = vmatpush1.bf16.msra.mxu0 %v1179
    %1533 = vmatprep.subr.bf16.mxu0 %v1176
    %1534 = vmatpush1.bf16.msra.mxu0 %v1175
    %1535 = vmatprep.subr.bf16.mxu0 %v1172
    %1536 = vmatpush1.bf16.msra.mxu0 %v1171
    %1537 = vmatprep.subr.bf16.mxu0 %v1168
    %1538 = vmatpush1.bf16.msra.mxu0 %v1167
    %1539 = vmatprep.subr.bf16.mxu0 %v1164
    %1540 = vmatpush1.bf16.msra.mxu0 %v1163
    %1541 = vmatprep.subr.bf16.mxu0 %v1224
    %1542 = vmatpush2.bf16.msra.mxu0 %v1223
    %1543 = vmatprep.subr.bf16.mxu0 %v1220
    %1544 = vmatpush2.bf16.msra.mxu0 %v1219
    %1545 = vmatprep.subr.bf16.mxu0 %v1216
    %1546 = vmatpush2.bf16.msra.mxu0 %v1215
    %1547 = vmatprep.subr.bf16.mxu0 %v1212
    %1548 = vmatpush2.bf16.msra.mxu0 %v1211
    %1549 = vmatprep.subr.bf16.mxu0 %v1208
    %1550 = vmatpush2.bf16.msra.mxu0 %v1207
    %1551 = vmatprep.subr.bf16.mxu0 %v1204
    %1552 = vmatpush2.bf16.msra.mxu0 %v1203
    %1553 = vmatprep.subr.bf16.mxu0 %v1200
    %1554 = vmatpush2.bf16.msra.mxu0 %v1199
    %1555 = vmatprep.subr.bf16.mxu0 %v1196
    %1556 = vmatpush2.bf16.msra.mxu0 %v1195
    %1557 = vmatprep.mubr.bf16.mxu0 %v440
    %1558 = vmatmul.mubr.bf16.gmra.mxu0 %v439
    %v1559 = vpop.f32.mrf.mxu0
    %v1560 = vadd.f32 %v1507, %v1559
    %v1561 = vpop.f32.mrf.mxu0
    %v1562 = vadd.f32 %v1509, %v1561
    %v1563 = vpop.f32.mrf.mxu0
    %v1564 = vadd.f32 %v1511, %v1563
    %v1565 = vpop.f32.mrf.mxu0
    %v1566 = vadd.f32 %v1513, %v1565
    %1567 = vmatprep.mubr.bf16.mxu0 %v446
    %1568 = vmatmul.mubr.bf16.gmra.mxu0 %v445
    %v1569 = vpop.f32.mrf.mxu0
    %v1570 = vadd.f32 %v1517, %v1569
    %v1571 = vpop.f32.mrf.mxu0
    %v1572 = vadd.f32 %v1519, %v1571
    %v1573 = vpop.f32.mrf.mxu0
    %v1574 = vadd.f32 %v1521, %v1573
    %v1575 = vpop.f32.mrf.mxu0
    %v1576 = vadd.f32 %v1523, %v1575
    %1577 = vdwg.mxu0
    %1578 = vmatprep.subr.bf16.mxu0 %v1066
    %1579 = vmatpush1.bf16.msra.mxu0 %v1065
    %1580 = vmatprep.subr.bf16.mxu0 %v1062
    %1581 = vmatpush1.bf16.msra.mxu0 %v1061
    %1582 = vmatprep.subr.bf16.mxu0 %v1058
    %1583 = vmatpush1.bf16.msra.mxu0 %v1057
    %1584 = vmatprep.subr.bf16.mxu0 %v1054
    %1585 = vmatpush1.bf16.msra.mxu0 %v1053
    %1586 = vmatprep.subr.bf16.mxu0 %v1050
    %1587 = vmatpush1.bf16.msra.mxu0 %v1049
    %1588 = vmatprep.subr.bf16.mxu0 %v1046
    %1589 = vmatpush1.bf16.msra.mxu0 %v1045
    %1590 = vmatprep.subr.bf16.mxu0 %v1042
    %1591 = vmatpush1.bf16.msra.mxu0 %v1041
    %1592 = vmatprep.subr.bf16.mxu0 %v1038
    %1593 = vmatpush1.bf16.msra.mxu0 %v1037
    %1594 = vmatprep.subr.bf16.mxu0 %v1098
    %1595 = vmatpush2.bf16.msra.mxu0 %v1097
    %1596 = vmatprep.subr.bf16.mxu0 %v1094
    %1597 = vmatpush2.bf16.msra.mxu0 %v1093
    %1598 = vmatprep.subr.bf16.mxu0 %v1090
    %1599 = vmatpush2.bf16.msra.mxu0 %v1089
    %1600 = vmatprep.subr.bf16.mxu0 %v1086
    %1601 = vmatpush2.bf16.msra.mxu0 %v1085
    %1602 = vmatprep.subr.bf16.mxu0 %v1082
    %1603 = vmatpush2.bf16.msra.mxu0 %v1081
    %1604 = vmatprep.subr.bf16.mxu0 %v1078
    %1605 = vmatpush2.bf16.msra.mxu0 %v1077
    %1606 = vmatprep.subr.bf16.mxu0 %v1074
    %1607 = vmatpush2.bf16.msra.mxu0 %v1073
    %1608 = vmatprep.subr.bf16.mxu0 %v1070
    %1609 = vmatpush2.bf16.msra.mxu0 %v1069
    %1610 = vmatprep.mubr.bf16.mxu0 %v436
    %1611 = vmatmul.mubr.bf16.gmra.mxu0 %v435
    %v1612 = vpop.f32.mrf.mxu0
    %v1613 = vadd.f32 %v390, %v1612
    %v1614 = vpop.f32.mrf.mxu0
    %v1615 = vadd.f32 %v394, %v1614
    %v1616 = vpop.f32.mrf.mxu0
    %v1617 = vadd.f32 %v390, %v1616
    %v1618 = vpop.f32.mrf.mxu0
    %v1619 = vadd.f32 %v394, %v1618
    %1620 = vmatprep.mubr.bf16.mxu0 %v442
    %1621 = vmatmul.mubr.bf16.gmra.mxu0 %v441
    %v1622 = vpop.f32.mrf.mxu0
    %v1623 = vadd.f32 %v390, %v1622
    %v1624 = vpop.f32.mrf.mxu0
    %v1625 = vadd.f32 %v394, %v1624
    %v1626 = vpop.f32.mrf.mxu0
    %v1627 = vadd.f32 %v390, %v1626
    %v1628 = vpop.f32.mrf.mxu0
    %v1629 = vadd.f32 %v394, %v1628
    %1630 = vdwg.mxu0
    %1631 = vmatprep.subr.bf16.mxu0 %v1130
    %1632 = vmatpush1.bf16.msra.mxu0 %v1129
    %1633 = vmatprep.subr.bf16.mxu0 %v1126
    %1634 = vmatpush1.bf16.msra.mxu0 %v1125
    %1635 = vmatprep.subr.bf16.mxu0 %v1122
    %1636 = vmatpush1.bf16.msra.mxu0 %v1121
    %1637 = vmatprep.subr.bf16.mxu0 %v1118
    %1638 = vmatpush1.bf16.msra.mxu0 %v1117
    %1639 = vmatprep.subr.bf16.mxu0 %v1114
    %1640 = vmatpush1.bf16.msra.mxu0 %v1113
    %1641 = vmatprep.subr.bf16.mxu0 %v1110
    %1642 = vmatpush1.bf16.msra.mxu0 %v1109
    %1643 = vmatprep.subr.bf16.mxu0 %v1106
    %1644 = vmatpush1.bf16.msra.mxu0 %v1105
    %1645 = vmatprep.subr.bf16.mxu0 %v1102
    %1646 = vmatpush1.bf16.msra.mxu0 %v1101
    %1647 = vmatprep.subr.bf16.mxu0 %v1162
    %1648 = vmatpush2.bf16.msra.mxu0 %v1161
    %1649 = vmatprep.subr.bf16.mxu0 %v1158
    %1650 = vmatpush2.bf16.msra.mxu0 %v1157
    %1651 = vmatprep.subr.bf16.mxu0 %v1154
    %1652 = vmatpush2.bf16.msra.mxu0 %v1153
    %1653 = vmatprep.subr.bf16.mxu0 %v1150
    %1654 = vmatpush2.bf16.msra.mxu0 %v1149
    %1655 = vmatprep.subr.bf16.mxu0 %v1146
    %1656 = vmatpush2.bf16.msra.mxu0 %v1145
    %1657 = vmatprep.subr.bf16.mxu0 %v1142
    %1658 = vmatpush2.bf16.msra.mxu0 %v1141
    %1659 = vmatprep.subr.bf16.mxu0 %v1138
    %1660 = vmatpush2.bf16.msra.mxu0 %v1137
    %1661 = vmatprep.subr.bf16.mxu0 %v1134
    %1662 = vmatpush2.bf16.msra.mxu0 %v1133
    %1663 = vmatprep.mubr.bf16.mxu0 %v438
    %1664 = vmatmul.mubr.bf16.gmra.mxu0 %v437
    %v1665 = vpop.f32.mrf.mxu0
    %v1666 = vadd.f32 %v1613, %v1665
    %v1667 = vpop.f32.mrf.mxu0
    %v1668 = vadd.f32 %v1615, %v1667
    %v1669 = vpop.f32.mrf.mxu0
    %v1670 = vadd.f32 %v1617, %v1669
    %v1671 = vpop.f32.mrf.mxu0
    %v1672 = vadd.f32 %v1619, %v1671
    %1673 = vmatprep.mubr.bf16.mxu0 %v444
    %1674 = vmatmul.mubr.bf16.gmra.mxu0 %v443
    %v1675 = vpop.f32.mrf.mxu0
    %v1676 = vadd.f32 %v1623, %v1675
    %v1677 = vpop.f32.mrf.mxu0
    %v1678 = vadd.f32 %v1625, %v1677
    %v1679 = vpop.f32.mrf.mxu0
    %v1680 = vadd.f32 %v1627, %v1679
    %v1681 = vpop.f32.mrf.mxu0
    %v1682 = vadd.f32 %v1629, %v1681
    %1683 = vdwg.mxu0
    %1684 = vmatprep.subr.bf16.mxu0 %v1194
    %1685 = vmatpush1.bf16.msra.mxu0 %v1193
    %1686 = vmatprep.subr.bf16.mxu0 %v1190
    %1687 = vmatpush1.bf16.msra.mxu0 %v1189
    %1688 = vmatprep.subr.bf16.mxu0 %v1186
    %1689 = vmatpush1.bf16.msra.mxu0 %v1185
    %1690 = vmatprep.subr.bf16.mxu0 %v1182
    %1691 = vmatpush1.bf16.msra.mxu0 %v1181
    %1692 = vmatprep.subr.bf16.mxu0 %v1178
    %1693 = vmatpush1.bf16.msra.mxu0 %v1177
    %1694 = vmatprep.subr.bf16.mxu0 %v1174
    %1695 = vmatpush1.bf16.msra.mxu0 %v1173
    %1696 = vmatprep.subr.bf16.mxu0 %v1170
    %1697 = vmatpush1.bf16.msra.mxu0 %v1169
    %1698 = vmatprep.subr.bf16.mxu0 %v1166
    %1699 = vmatpush1.bf16.msra.mxu0 %v1165
    %1700 = vmatprep.subr.bf16.mxu0 %v1226
    %1701 = vmatpush2.bf16.msra.mxu0 %v1225
    %1702 = vmatprep.subr.bf16.mxu0 %v1222
    %1703 = vmatpush2.bf16.msra.mxu0 %v1221
    %1704 = vmatprep.subr.bf16.mxu0 %v1218
    %1705 = vmatpush2.bf16.msra.mxu0 %v1217
    %1706 = vmatprep.subr.bf16.mxu0 %v1214
    %1707 = vmatpush2.bf16.msra.mxu0 %v1213
    %1708 = vmatprep.subr.bf16.mxu0 %v1210
    %1709 = vmatpush2.bf16.msra.mxu0 %v1209
    %1710 = vmatprep.subr.bf16.mxu0 %v1206
    %1711 = vmatpush2.bf16.msra.mxu0 %v1205
    %1712 = vmatprep.subr.bf16.mxu0 %v1202
    %1713 = vmatpush2.bf16.msra.mxu0 %v1201
    %1714 = vmatprep.subr.bf16.mxu0 %v1198
    %1715 = vmatpush2.bf16.msra.mxu0 %v1197
    %1716 = vmatprep.mubr.bf16.mxu0 %v440
    %1717 = vmatmul.mubr.bf16.gmra.mxu0 %v439
    %v1718 = vpop.f32.mrf.mxu0
    %v1719 = vadd.f32 %v1666, %v1718
    %v1720 = vpop.f32.mrf.mxu0
    %v1721 = vadd.f32 %v1668, %v1720
    %v1722 = vpop.f32.mrf.mxu0
    %v1723 = vadd.f32 %v1670, %v1722
    %v1724 = vpop.f32.mrf.mxu0
    %v1725 = vadd.f32 %v1672, %v1724
    %1726 = vmatprep.mubr.bf16.mxu0 %v446
    %1727 = vmatmul.mubr.bf16.gmra.mxu0 %v445
    %v1728 = vpop.f32.mrf.mxu0
    %v1729 = vadd.f32 %v1676, %v1728
    %v1730 = vpop.f32.mrf.mxu0
    %v1731 = vadd.f32 %v1678, %v1730
    %v1732 = vpop.f32.mrf.mxu0
    %v1733 = vadd.f32 %v1680, %v1732
    %v1734 = vpop.f32.mrf.mxu0
    %v1735 = vadd.f32 %v1682, %v1734
    %1736 = vdwg.mxu0
    %v1737 = vmul.f32 %v1560, 0.2
    %v1738 = vmul.f32 %v1562, 0.2
    %v1739 = vmul.f32 %v1719, 0.2
    %v1740 = vmul.f32 %v1721, 0.2
    %v1741 = vmul.f32 %v1564, 0.2
    %v1742 = vmul.f32 %v1566, 0.2
    %v1743 = vmul.f32 %v1723, 0.2
    %v1744 = vmul.f32 %v1725, 0.2
    %v1745 = vmul.f32 %v1570, 0.2
    %v1746 = vmul.f32 %v1572, 0.2
    %v1747 = vmul.f32 %v1729, 0.2
    %v1748 = vmul.f32 %v1731, 0.2
    %v1749 = vmul.f32 %v1574, 0.2
    %v1750 = vmul.f32 %v1576, 0.2
    %v1751 = vmul.f32 %v1733, 0.2
    %v1752 = vmul.f32 %v1735, 0.2
    %v1753 = vmax.f32 %v1560, %v1737
    %v1754 = vmax.f32 %v1562, %v1738
    %v1755 = vmax.f32 %v1719, %v1739
    %v1756 = vmax.f32 %v1721, %v1740
    %v1757 = vmax.f32 %v1564, %v1741
    %v1758 = vmax.f32 %v1566, %v1742
    %v1759 = vmax.f32 %v1723, %v1743
    %v1760 = vmax.f32 %v1725, %v1744
    %v1761 = vmax.f32 %v1570, %v1745
    %v1762 = vmax.f32 %v1572, %v1746
    %v1763 = vmax.f32 %v1729, %v1747
    %v1764 = vmax.f32 %v1731, %v1748
    %v1765 = vmax.f32 %v1574, %v1749
    %v1766 = vmax.f32 %v1576, %v1750
    %v1767 = vmax.f32 %v1733, %v1751
    %v1768 = vmax.f32 %v1735, %v1752
    %v1769 = vpack.c.bf16 %v1757, %v1753
    %v1770 = vpack.c.bf16 %v1758, %v1754
    %v1771 = vpack.c.bf16 %v1759, %v1755
    %v1772 = vpack.c.bf16 %v1760, %v1756
    %v1773 = vpack.c.bf16 %v1765, %v1761
    %v1774 = vpack.c.bf16 %v1766, %v1762
    %v1775 = vpack.c.bf16 %v1767, %v1763
    %v1776 = vpack.c.bf16 %v1768, %v1764
    %v1777 = vld [vmem:[#allocation6] sm:$0xff]
    %v1778 = vld [vmem:[#allocation6 + $0x8] sm:$0xff]
    %v1779 = vld [vmem:[#allocation6 + $0x10] sm:$0xff]
    %v1780 = vld [vmem:[#allocation6 + $0x18] sm:$0xff]
    %v1781 = vld [vmem:[#allocation6 + $0x20] sm:$0xff]
    %v1782 = vld [vmem:[#allocation6 + $0x28] sm:$0xff]
    %v1783 = vld [vmem:[#allocation6 + $0x30] sm:$0xff]
    %v1784 = vld [vmem:[#allocation6 + $0x38] sm:$0xff]
    %v1785 = vld [vmem:[#allocation6 + $0x40] sm:$0xff]
    %v1786 = vld [vmem:[#allocation6 + $0x48] sm:$0xff]
    %v1787 = vld [vmem:[#allocation6 + $0x50] sm:$0xff]
    %v1788 = vld [vmem:[#allocation6 + $0x58] sm:$0xff]
    %v1789 = vld [vmem:[#allocation6 + $0x60] sm:$0xff]
    %v1790 = vld [vmem:[#allocation6 + $0x68] sm:$0xff]
    %v1791 = vld [vmem:[#allocation6 + $0x70] sm:$0xff]
    %v1792 = vld [vmem:[#allocation6 + $0x78] sm:$0xff]
    %v1793 = vld [vmem:[#allocation6 + $0x80] sm:$0xff]
    %v1794 = vld [vmem:[#allocation6 + $0x88] sm:$0xff]
    %v1795 = vld [vmem:[#allocation6 + $0x90] sm:$0xff]
    %v1796 = vld [vmem:[#allocation6 + $0x98] sm:$0xff]
    %v1797 = vld [vmem:[#allocation6 + $0xa0] sm:$0xff]
    %v1798 = vld [vmem:[#allocation6 + $0xa8] sm:$0xff]
    %v1799 = vld [vmem:[#allocation6 + $0xb0] sm:$0xff]
    %v1800 = vld [vmem:[#allocation6 + $0xb8] sm:$0xff]
    %v1801 = vld [vmem:[#allocation6 + $0xc0] sm:$0xff]
    %v1802 = vld [vmem:[#allocation6 + $0xc8] sm:$0xff]
    %v1803 = vld [vmem:[#allocation6 + $0xd0] sm:$0xff]
    %v1804 = vld [vmem:[#allocation6 + $0xd8] sm:$0xff]
    %v1805 = vld [vmem:[#allocation6 + $0xe0] sm:$0xff]
    %v1806 = vld [vmem:[#allocation6 + $0xe8] sm:$0xff]
    %v1807 = vld [vmem:[#allocation6 + $0xf0] sm:$0xff]
    %v1808 = vld [vmem:[#allocation6 + $0xf8] sm:$0xff]
    %v1809 = vld [vmem:[#allocation6 + $0x100] sm:$0xff]
    %v1810 = vld [vmem:[#allocation6 + $0x108] sm:$0xff]
    %v1811 = vld [vmem:[#allocation6 + $0x110] sm:$0xff]
    %v1812 = vld [vmem:[#allocation6 + $0x118] sm:$0xff]
    %v1813 = vld [vmem:[#allocation6 + $0x120] sm:$0xff]
    %v1814 = vld [vmem:[#allocation6 + $0x128] sm:$0xff]
    %v1815 = vld [vmem:[#allocation6 + $0x130] sm:$0xff]
    %v1816 = vld [vmem:[#allocation6 + $0x138] sm:$0xff]
    %v1817 = vld [vmem:[#allocation6 + $0x140] sm:$0xff]
    %v1818 = vld [vmem:[#allocation6 + $0x148] sm:$0xff]
    %v1819 = vld [vmem:[#allocation6 + $0x150] sm:$0xff]
    %v1820 = vld [vmem:[#allocation6 + $0x158] sm:$0xff]
    %v1821 = vld [vmem:[#allocation6 + $0x160] sm:$0xff]
    %v1822 = vld [vmem:[#allocation6 + $0x168] sm:$0xff]
    %v1823 = vld [vmem:[#allocation6 + $0x170] sm:$0xff]
    %v1824 = vld [vmem:[#allocation6 + $0x178] sm:$0xff]
    %v1825 = vld [vmem:[#allocation6 + $0x180] sm:$0xff]
    %v1826 = vld [vmem:[#allocation6 + $0x188] sm:$0xff]
    %v1827 = vld [vmem:[#allocation6 + $0x190] sm:$0xff]
    %v1828 = vld [vmem:[#allocation6 + $0x198] sm:$0xff]
    %v1829 = vld [vmem:[#allocation6 + $0x1a0] sm:$0xff]
    %v1830 = vld [vmem:[#allocation6 + $0x1a8] sm:$0xff]
    %v1831 = vld [vmem:[#allocation6 + $0x1b0] sm:$0xff]
    %v1832 = vld [vmem:[#allocation6 + $0x1b8] sm:$0xff]
    %v1833 = vld [vmem:[#allocation6 + $0x1c0] sm:$0xff]
    %v1834 = vld [vmem:[#allocation6 + $0x1c8] sm:$0xff]
    %v1835 = vld [vmem:[#allocation6 + $0x1d0] sm:$0xff]
    %v1836 = vld [vmem:[#allocation6 + $0x1d8] sm:$0xff]
    %v1837 = vld [vmem:[#allocation6 + $0x1e0] sm:$0xff]
    %v1838 = vld [vmem:[#allocation6 + $0x1e8] sm:$0xff]
    %v1839 = vld [vmem:[#allocation6 + $0x1f0] sm:$0xff]
    %v1840 = vld [vmem:[#allocation6 + $0x1f8] sm:$0xff]
    %v1841 = vld [vmem:[%s5] sm:$0x3]
    %v1843 = vlaneseq
    %v1844 = vshrl.u32 %v1843, 7
    %v1845 = vsub.s32 0, %v1844
    %v1846 = vrot.slane %v1841, %v1845
    %v1847 = vlaneseq
    %v1848 = vshrl.u32 %v1847, 7
    %v1849 = vsub.s32 1, %v1848
    %v1850 = vrot.slane %v1841, %v1849
    %v1917 = vunpack.c.l.b16 %v1777
    %v1918 = vunpack.c.h.b16 %v1777
    %v1919 = vunpack.c.l.b16 %v1778
    %v1920 = vunpack.c.h.b16 %v1778
    %v1921 = vunpack.c.l.b16 %v1779
    %v1922 = vunpack.c.h.b16 %v1779
    %v1923 = vunpack.c.l.b16 %v1780
    %v1924 = vunpack.c.h.b16 %v1780
    %v1925 = vunpack.c.l.b16 %v1781
    %v1926 = vunpack.c.h.b16 %v1781
    %v1927 = vunpack.c.l.b16 %v1782
    %v1928 = vunpack.c.h.b16 %v1782
    %v1929 = vunpack.c.l.b16 %v1783
    %v1930 = vunpack.c.h.b16 %v1783
    %v1931 = vunpack.c.l.b16 %v1784
    %v1932 = vunpack.c.h.b16 %v1784
    %v1933 = vunpack.c.l.b16 %v1785
    %v1934 = vunpack.c.h.b16 %v1785
    %v1935 = vunpack.c.l.b16 %v1786
    %v1936 = vunpack.c.h.b16 %v1786
    %v1937 = vunpack.c.l.b16 %v1787
    %v1938 = vunpack.c.h.b16 %v1787
    %v1939 = vunpack.c.l.b16 %v1788
    %v1940 = vunpack.c.h.b16 %v1788
    %v1941 = vunpack.c.l.b16 %v1789
    %v1942 = vunpack.c.h.b16 %v1789
    %v1943 = vunpack.c.l.b16 %v1790
    %v1944 = vunpack.c.h.b16 %v1790
    %v1945 = vunpack.c.l.b16 %v1791
    %v1946 = vunpack.c.h.b16 %v1791
    %v1947 = vunpack.c.l.b16 %v1792
    %v1948 = vunpack.c.h.b16 %v1792
    %v1949 = vunpack.c.l.b16 %v1793
    %v1950 = vunpack.c.h.b16 %v1793
    %v1951 = vunpack.c.l.b16 %v1794
    %v1952 = vunpack.c.h.b16 %v1794
    %v1953 = vunpack.c.l.b16 %v1795
    %v1954 = vunpack.c.h.b16 %v1795
    %v1955 = vunpack.c.l.b16 %v1796
    %v1956 = vunpack.c.h.b16 %v1796
    %v1957 = vunpack.c.l.b16 %v1797
    %v1958 = vunpack.c.h.b16 %v1797
    %v1959 = vunpack.c.l.b16 %v1798
    %v1960 = vunpack.c.h.b16 %v1798
    %v1961 = vunpack.c.l.b16 %v1799
    %v1962 = vunpack.c.h.b16 %v1799
    %v1963 = vunpack.c.l.b16 %v1800
    %v1964 = vunpack.c.h.b16 %v1800
    %v1965 = vunpack.c.l.b16 %v1801
    %v1966 = vunpack.c.h.b16 %v1801
    %v1967 = vunpack.c.l.b16 %v1802
    %v1968 = vunpack.c.h.b16 %v1802
    %v1969 = vunpack.c.l.b16 %v1803
    %v1970 = vunpack.c.h.b16 %v1803
    %v1971 = vunpack.c.l.b16 %v1804
    %v1972 = vunpack.c.h.b16 %v1804
    %v1973 = vunpack.c.l.b16 %v1805
    %v1974 = vunpack.c.h.b16 %v1805
    %v1975 = vunpack.c.l.b16 %v1806
    %v1976 = vunpack.c.h.b16 %v1806
    %v1977 = vunpack.c.l.b16 %v1807
    %v1978 = vunpack.c.h.b16 %v1807
    %v1979 = vunpack.c.l.b16 %v1808
    %v1980 = vunpack.c.h.b16 %v1808
    %v1981 = vunpack.c.l.b16 %v1809
    %v1982 = vunpack.c.h.b16 %v1809
    %v1983 = vunpack.c.l.b16 %v1810
    %v1984 = vunpack.c.h.b16 %v1810
    %v1985 = vunpack.c.l.b16 %v1811
    %v1986 = vunpack.c.h.b16 %v1811
    %v1987 = vunpack.c.l.b16 %v1812
    %v1988 = vunpack.c.h.b16 %v1812
    %v1989 = vunpack.c.l.b16 %v1813
    %v1990 = vunpack.c.h.b16 %v1813
    %v1991 = vunpack.c.l.b16 %v1814
    %v1992 = vunpack.c.h.b16 %v1814
    %v1993 = vunpack.c.l.b16 %v1815
    %v1994 = vunpack.c.h.b16 %v1815
    %v1995 = vunpack.c.l.b16 %v1816
    %v1996 = vunpack.c.h.b16 %v1816
    %v1997 = vunpack.c.l.b16 %v1817
    %v1998 = vunpack.c.h.b16 %v1817
    %v1999 = vunpack.c.l.b16 %v1818
    %v2000 = vunpack.c.h.b16 %v1818
    %v2001 = vunpack.c.l.b16 %v1819
    %v2002 = vunpack.c.h.b16 %v1819
    %v2003 = vunpack.c.l.b16 %v1820
    %v2004 = vunpack.c.h.b16 %v1820
    %v2005 = vunpack.c.l.b16 %v1821
    %v2006 = vunpack.c.h.b16 %v1821
    %v2007 = vunpack.c.l.b16 %v1822
    %v2008 = vunpack.c.h.b16 %v1822
    %v2009 = vunpack.c.l.b16 %v1823
    %v2010 = vunpack.c.h.b16 %v1823
    %v2011 = vunpack.c.l.b16 %v1824
    %v2012 = vunpack.c.h.b16 %v1824
    %v2013 = vunpack.c.l.b16 %v1825
    %v2014 = vunpack.c.h.b16 %v1825
    %v2015 = vunpack.c.l.b16 %v1826
    %v2016 = vunpack.c.h.b16 %v1826
    %v2017 = vunpack.c.l.b16 %v1827
    %v2018 = vunpack.c.h.b16 %v1827
    %v2019 = vunpack.c.l.b16 %v1828
    %v2020 = vunpack.c.h.b16 %v1828
    %v2021 = vunpack.c.l.b16 %v1829
    %v2022 = vunpack.c.h.b16 %v1829
    %v2023 = vunpack.c.l.b16 %v1830
    %v2024 = vunpack.c.h.b16 %v1830
    %v2025 = vunpack.c.l.b16 %v1831
    %v2026 = vunpack.c.h.b16 %v1831
    %v2027 = vunpack.c.l.b16 %v1832
    %v2028 = vunpack.c.h.b16 %v1832
    %v2029 = vunpack.c.l.b16 %v1833
    %v2030 = vunpack.c.h.b16 %v1833
    %v2031 = vunpack.c.l.b16 %v1834
    %v2032 = vunpack.c.h.b16 %v1834
    %v2033 = vunpack.c.l.b16 %v1835
    %v2034 = vunpack.c.h.b16 %v1835
    %v2035 = vunpack.c.l.b16 %v1836
    %v2036 = vunpack.c.h.b16 %v1836
    %v2037 = vunpack.c.l.b16 %v1837
    %v2038 = vunpack.c.h.b16 %v1837
    %v2039 = vunpack.c.l.b16 %v1838
    %v2040 = vunpack.c.h.b16 %v1838
    %v2041 = vunpack.c.l.b16 %v1839
    %v2042 = vunpack.c.h.b16 %v1839
    %v2043 = vunpack.c.l.b16 %v1840
    %v2044 = vunpack.c.h.b16 %v1840
    %v2045 = vpack.c.b16 %v1919, %v1917
    %v2046 = vpack.c.b16 %v1920, %v1918
    %v2047 = vpack.c.b16 %v1923, %v1921
    %v2048 = vpack.c.b16 %v1924, %v1922
    %v2049 = vpack.c.b16 %v1927, %v1925
    %v2050 = vpack.c.b16 %v1928, %v1926
    %v2051 = vpack.c.b16 %v1931, %v1929
    %v2052 = vpack.c.b16 %v1932, %v1930
    %v2053 = vpack.c.b16 %v1935, %v1933
    %v2054 = vpack.c.b16 %v1936, %v1934
    %v2055 = vpack.c.b16 %v1939, %v1937
    %v2056 = vpack.c.b16 %v1940, %v1938
    %v2057 = vpack.c.b16 %v1943, %v1941
    %v2058 = vpack.c.b16 %v1944, %v1942
    %v2059 = vpack.c.b16 %v1947, %v1945
    %v2060 = vpack.c.b16 %v1948, %v1946
    %v2061 = vpack.c.b16 %v1951, %v1949
    %v2062 = vpack.c.b16 %v1952, %v1950
    %v2063 = vpack.c.b16 %v1955, %v1953
    %v2064 = vpack.c.b16 %v1956, %v1954
    %v2065 = vpack.c.b16 %v1959, %v1957
    %v2066 = vpack.c.b16 %v1960, %v1958
    %v2067 = vpack.c.b16 %v1963, %v1961
    %v2068 = vpack.c.b16 %v1964, %v1962
    %v2069 = vpack.c.b16 %v1967, %v1965
    %v2070 = vpack.c.b16 %v1968, %v1966
    %v2071 = vpack.c.b16 %v1971, %v1969
    %v2072 = vpack.c.b16 %v1972, %v1970
    %v2073 = vpack.c.b16 %v1975, %v1973
    %v2074 = vpack.c.b16 %v1976, %v1974
    %v2075 = vpack.c.b16 %v1979, %v1977
    %v2076 = vpack.c.b16 %v1980, %v1978
    %v2077 = vpack.c.b16 %v1983, %v1981
    %v2078 = vpack.c.b16 %v1984, %v1982
    %v2079 = vpack.c.b16 %v1987, %v1985
    %v2080 = vpack.c.b16 %v1988, %v1986
    %v2081 = vpack.c.b16 %v1991, %v1989
    %v2082 = vpack.c.b16 %v1992, %v1990
    %v2083 = vpack.c.b16 %v1995, %v1993
    %v2084 = vpack.c.b16 %v1996, %v1994
    %v2085 = vpack.c.b16 %v1999, %v1997
    %v2086 = vpack.c.b16 %v2000, %v1998
    %v2087 = vpack.c.b16 %v2003, %v2001
    %v2088 = vpack.c.b16 %v2004, %v2002
    %v2089 = vpack.c.b16 %v2007, %v2005
    %v2090 = vpack.c.b16 %v2008, %v2006
    %v2091 = vpack.c.b16 %v2011, %v2009
    %v2092 = vpack.c.b16 %v2012, %v2010
    %v2093 = vpack.c.b16 %v2015, %v2013
    %v2094 = vpack.c.b16 %v2016, %v2014
    %v2095 = vpack.c.b16 %v2019, %v2017
    %v2096 = vpack.c.b16 %v2020, %v2018
    %v2097 = vpack.c.b16 %v2023, %v2021
    %v2098 = vpack.c.b16 %v2024, %v2022
    %v2099 = vpack.c.b16 %v2027, %v2025
    %v2100 = vpack.c.b16 %v2028, %v2026
    %v2101 = vpack.c.b16 %v2031, %v2029
    %v2102 = vpack.c.b16 %v2032, %v2030
    %v2103 = vpack.c.b16 %v2035, %v2033
    %v2104 = vpack.c.b16 %v2036, %v2034
    %v2105 = vpack.c.b16 %v2039, %v2037
    %v2106 = vpack.c.b16 %v2040, %v2038
    %v2107 = vpack.c.b16 %v2043, %v2041
    %v2108 = vpack.c.b16 %v2044, %v2042
    %2173 = vmatprep.subr.bf16.mxu0 %v2060
    %2174 = vmatpush1.bf16.msra.mxu0 %v2059
    %2175 = vmatprep.subr.bf16.mxu0 %v2058
    %2176 = vmatpush1.bf16.msra.mxu0 %v2057
    %2177 = vmatprep.subr.bf16.mxu0 %v2056
    %2178 = vmatpush1.bf16.msra.mxu0 %v2055
    %2179 = vmatprep.subr.bf16.mxu0 %v2054
    %2180 = vmatpush1.bf16.msra.mxu0 %v2053
    %2181 = vmatprep.subr.bf16.mxu0 %v2052
    %2182 = vmatpush1.bf16.msra.mxu0 %v2051
    %2183 = vmatprep.subr.bf16.mxu0 %v2050
    %2184 = vmatpush1.bf16.msra.mxu0 %v2049
    %2185 = vmatprep.subr.bf16.mxu0 %v2048
    %2186 = vmatpush1.bf16.msra.mxu0 %v2047
    %2187 = vmatprep.subr.bf16.mxu0 %v2046
    %2188 = vmatpush1.bf16.msra.mxu0 %v2045
    %2189 = vmatprep.subr.bf16.mxu0 %v2076
    %2190 = vmatpush2.bf16.msra.mxu0 %v2075
    %2191 = vmatprep.subr.bf16.mxu0 %v2074
    %2192 = vmatpush2.bf16.msra.mxu0 %v2073
    %2193 = vmatprep.subr.bf16.mxu0 %v2072
    %2194 = vmatpush2.bf16.msra.mxu0 %v2071
    %2195 = vmatprep.subr.bf16.mxu0 %v2070
    %2196 = vmatpush2.bf16.msra.mxu0 %v2069
    %2197 = vmatprep.subr.bf16.mxu0 %v2068
    %2198 = vmatpush2.bf16.msra.mxu0 %v2067
    %2199 = vmatprep.subr.bf16.mxu0 %v2066
    %2200 = vmatpush2.bf16.msra.mxu0 %v2065
    %2201 = vmatprep.subr.bf16.mxu0 %v2064
    %2202 = vmatpush2.bf16.msra.mxu0 %v2063
    %2203 = vmatprep.subr.bf16.mxu0 %v2062
    %2204 = vmatpush2.bf16.msra.mxu0 %v2061
    %2205 = vmatprep.mubr.bf16.mxu0 %v1770
    %2206 = vmatmul.mubr.bf16.gmra.mxu0 %v1769
    %v2207 = vpop.f32.mrf.mxu0
    %v2208 = vadd.f32 %v1846, %v2207
    %v2209 = vpop.f32.mrf.mxu0
    %v2210 = vadd.f32 %v1850, %v2209
    %v2211 = vpop.f32.mrf.mxu0
    %v2212 = vadd.f32 %v1846, %v2211
    %v2213 = vpop.f32.mrf.mxu0
    %v2214 = vadd.f32 %v1850, %v2213
    %2215 = vmatprep.mubr.bf16.mxu0 %v1774
    %2216 = vmatmul.mubr.bf16.gmra.mxu0 %v1773
    %v2217 = vpop.f32.mrf.mxu0
    %v2218 = vadd.f32 %v1846, %v2217
    %v2219 = vpop.f32.mrf.mxu0
    %v2220 = vadd.f32 %v1850, %v2219
    %v2221 = vpop.f32.mrf.mxu0
    %v2222 = vadd.f32 %v1846, %v2221
    %v2223 = vpop.f32.mrf.mxu0
    %v2224 = vadd.f32 %v1850, %v2223
    %2225 = vdwg.mxu0
    %2226 = vmatprep.subr.bf16.mxu0 %v2092
    %2227 = vmatpush1.bf16.msra.mxu0 %v2091
    %2228 = vmatprep.subr.bf16.mxu0 %v2090
    %2229 = vmatpush1.bf16.msra.mxu0 %v2089
    %2230 = vmatprep.subr.bf16.mxu0 %v2088
    %2231 = vmatpush1.bf16.msra.mxu0 %v2087
    %2232 = vmatprep.subr.bf16.mxu0 %v2086
    %2233 = vmatpush1.bf16.msra.mxu0 %v2085
    %2234 = vmatprep.subr.bf16.mxu0 %v2084
    %2235 = vmatpush1.bf16.msra.mxu0 %v2083
    %2236 = vmatprep.subr.bf16.mxu0 %v2082
    %2237 = vmatpush1.bf16.msra.mxu0 %v2081
    %2238 = vmatprep.subr.bf16.mxu0 %v2080
    %2239 = vmatpush1.bf16.msra.mxu0 %v2079
    %2240 = vmatprep.subr.bf16.mxu0 %v2078
    %2241 = vmatpush1.bf16.msra.mxu0 %v2077
    %2242 = vmatprep.subr.bf16.mxu0 %v2108
    %2243 = vmatpush2.bf16.msra.mxu0 %v2107
    %2244 = vmatprep.subr.bf16.mxu0 %v2106
    %2245 = vmatpush2.bf16.msra.mxu0 %v2105
    %2246 = vmatprep.subr.bf16.mxu0 %v2104
    %2247 = vmatpush2.bf16.msra.mxu0 %v2103
    %2248 = vmatprep.subr.bf16.mxu0 %v2102
    %2249 = vmatpush2.bf16.msra.mxu0 %v2101
    %2250 = vmatprep.subr.bf16.mxu0 %v2100
    %2251 = vmatpush2.bf16.msra.mxu0 %v2099
    %2252 = vmatprep.subr.bf16.mxu0 %v2098
    %2253 = vmatpush2.bf16.msra.mxu0 %v2097
    %2254 = vmatprep.subr.bf16.mxu0 %v2096
    %2255 = vmatpush2.bf16.msra.mxu0 %v2095
    %2256 = vmatprep.subr.bf16.mxu0 %v2094
    %2257 = vmatpush2.bf16.msra.mxu0 %v2093
    %2258 = vmatprep.mubr.bf16.mxu0 %v1772
    %2259 = vmatmul.mubr.bf16.gmra.mxu0 %v1771
    %v2260 = vpop.f32.mrf.mxu0
    %v2261 = vadd.f32 %v2208, %v2260
    %v2262 = vpop.f32.mrf.mxu0
    %v2263 = vadd.f32 %v2210, %v2262
    %v2264 = vpop.f32.mrf.mxu0
    %v2265 = vadd.f32 %v2212, %v2264
    %v2266 = vpop.f32.mrf.mxu0
    %v2267 = vadd.f32 %v2214, %v2266
    %2268 = vmatprep.mubr.bf16.mxu0 %v1776
    %2269 = vmatmul.mubr.bf16.gmra.mxu0 %v1775
    %v2270 = vpop.f32.mrf.mxu0
    %v2271 = vadd.f32 %v2218, %v2270
    %v2272 = vpop.f32.mrf.mxu0
    %v2273 = vadd.f32 %v2220, %v2272
    %v2274 = vpop.f32.mrf.mxu0
    %v2275 = vadd.f32 %v2222, %v2274
    %v2276 = vpop.f32.mrf.mxu0
    %v2277 = vadd.f32 %v2224, %v2276
    %2278 = vdwg.mxu0
    %v2279 = vmul.f32 %v2261, 0.2
    %v2280 = vmul.f32 %v2263, 0.2
    %v2281 = vmul.f32 %v2265, 0.2
    %v2282 = vmul.f32 %v2267, 0.2
    %v2283 = vmul.f32 %v2271, 0.2
    %v2284 = vmul.f32 %v2273, 0.2
    %v2285 = vmul.f32 %v2275, 0.2
    %v2286 = vmul.f32 %v2277, 0.2
    %v2287 = vmax.f32 %v2261, %v2279
    %v2288 = vmax.f32 %v2263, %v2280
    %v2289 = vmax.f32 %v2265, %v2281
    %v2290 = vmax.f32 %v2267, %v2282
    %v2291 = vmax.f32 %v2271, %v2283
    %v2292 = vmax.f32 %v2273, %v2284
    %v2293 = vmax.f32 %v2275, %v2285
    %v2294 = vmax.f32 %v2277, %v2286
    %v2295 = vld [vmem:[%s6] sm:$0xff]
    %v2296 = vld [vmem:[%s6 + $0x8] sm:$0xff]
    %v2297 = vld [vmem:[%s6 + $0x10] sm:$0xff]
    %v2298 = vld [vmem:[%s6 + $0x18] sm:$0xff]
    %v2299 = vld [vmem:[%s6 + $0x20] sm:$0xff]
    %v2300 = vld [vmem:[%s6 + $0x28] sm:$0xff]
    %v2301 = vld [vmem:[%s6 + $0x30] sm:$0xff]
    %v2302 = vld [vmem:[%s6 + $0x38] sm:$0xff]
    %v2303 = vld [vmem:[%s6 + $0x40] sm:$0xff]
    %v2304 = vld [vmem:[%s6 + $0x48] sm:$0xff]
    %v2305 = vld [vmem:[%s6 + $0x50] sm:$0xff]
    %v2306 = vld [vmem:[%s6 + $0x58] sm:$0xff]
    %v2307 = vld [vmem:[%s6 + $0x60] sm:$0xff]
    %v2308 = vld [vmem:[%s6 + $0x68] sm:$0xff]
    %v2309 = vld [vmem:[%s6 + $0x70] sm:$0xff]
    %v2310 = vld [vmem:[%s6 + $0x78] sm:$0xff]
    %v2311 = vld [vmem:[%s6 + $0x80] sm:$0xff]
    %v2312 = vld [vmem:[%s6 + $0x88] sm:$0xff]
    %v2313 = vld [vmem:[%s6 + $0x90] sm:$0xff]
    %v2314 = vld [vmem:[%s6 + $0x98] sm:$0xff]
    %v2315 = vld [vmem:[%s6 + $0xa0] sm:$0xff]
    %v2316 = vld [vmem:[%s6 + $0xa8] sm:$0xff]
    %v2317 = vld [vmem:[%s6 + $0xb0] sm:$0xff]
    %v2318 = vld [vmem:[%s6 + $0xb8] sm:$0xff]
    %v2319 = vld [vmem:[%s6 + $0xc0] sm:$0xff]
    %v2320 = vld [vmem:[%s6 + $0xc8] sm:$0xff]
    %v2321 = vld [vmem:[%s6 + $0xd0] sm:$0xff]
    %v2322 = vld [vmem:[%s6 + $0xd8] sm:$0xff]
    %v2323 = vld [vmem:[%s6 + $0xe0] sm:$0xff]
    %v2324 = vld [vmem:[%s6 + $0xe8] sm:$0xff]
    %v2325 = vld [vmem:[%s6 + $0xf0] sm:$0xff]
    %v2326 = vld [vmem:[%s6 + $0xf8] sm:$0xff]
    %v2327 = vld [vmem:[%s7] sm:$0x1]
    %v2329 = vlaneseq
    %v2330 = vshrl.u32 %v2329, 7
    %v2331 = vsub.s32 0, %v2330
    %v2332 = vrot.slane %v2327, %v2331
    %2334 = vmatprep.subr.mxu0 0.0
    %2335 = vmatpush1.msra.mxu0 %v2310
    %2336 = vmatprep.subr.mxu0 0.0
    %2337 = vmatpush1.msra.mxu0 %v2309
    %2338 = vmatprep.subr.mxu0 0.0
    %2339 = vmatpush1.msra.mxu0 %v2308
    %2340 = vmatprep.subr.mxu0 0.0
    %2341 = vmatpush1.msra.mxu0 %v2307
    %2342 = vmatprep.subr.mxu0 0.0
    %2343 = vmatpush1.msra.mxu0 %v2306
    %2344 = vmatprep.subr.mxu0 0.0
    %2345 = vmatpush1.msra.mxu0 %v2305
    %2346 = vmatprep.subr.mxu0 0.0
    %2347 = vmatpush1.msra.mxu0 %v2304
    %2348 = vmatprep.subr.mxu0 0.0
    %2349 = vmatpush1.msra.mxu0 %v2303
    %2350 = vmatprep.subr.mxu0 0.0
    %2351 = vmatpush1.msra.mxu0 %v2302
    %2352 = vmatprep.subr.mxu0 0.0
    %2353 = vmatpush1.msra.mxu0 %v2301
    %2354 = vmatprep.subr.mxu0 0.0
    %2355 = vmatpush1.msra.mxu0 %v2300
    %2356 = vmatprep.subr.mxu0 0.0
    %2357 = vmatpush1.msra.mxu0 %v2299
    %2358 = vmatprep.subr.mxu0 0.0
    %2359 = vmatpush1.msra.mxu0 %v2298
    %2360 = vmatprep.subr.mxu0 0.0
    %2361 = vmatpush1.msra.mxu0 %v2297
    %2362 = vmatprep.subr.mxu0 0.0
    %2363 = vmatpush1.msra.mxu0 %v2296
    %2364 = vmatprep.subr.mxu0 0.0
    %2365 = vmatpush1.msra.mxu0 %v2295
    %2366 = vmatprep.subr.mxu0 0.0
    %2367 = vmatpush2.msra.mxu0 %v2326
    %2368 = vmatprep.subr.mxu0 0.0
    %2369 = vmatpush2.msra.mxu0 %v2325
    %2370 = vmatprep.subr.mxu0 0.0
    %2371 = vmatpush2.msra.mxu0 %v2324
    %2372 = vmatprep.subr.mxu0 0.0
    %2373 = vmatpush2.msra.mxu0 %v2323
    %2374 = vmatprep.subr.mxu0 0.0
    %2375 = vmatpush2.msra.mxu0 %v2322
    %2376 = vmatprep.subr.mxu0 0.0
    %2377 = vmatpush2.msra.mxu0 %v2321
    %2378 = vmatprep.subr.mxu0 0.0
    %2379 = vmatpush2.msra.mxu0 %v2320
    %2380 = vmatprep.subr.mxu0 0.0
    %2381 = vmatpush2.msra.mxu0 %v2319
    %2382 = vmatprep.subr.mxu0 0.0
    %2383 = vmatpush2.msra.mxu0 %v2318
    %2384 = vmatprep.subr.mxu0 0.0
    %2385 = vmatpush2.msra.mxu0 %v2317
    %2386 = vmatprep.subr.mxu0 0.0
    %2387 = vmatpush2.msra.mxu0 %v2316
    %2388 = vmatprep.subr.mxu0 0.0
    %2389 = vmatpush2.msra.mxu0 %v2315
    %2390 = vmatprep.subr.mxu0 0.0
    %2391 = vmatpush2.msra.mxu0 %v2314
    %2392 = vmatprep.subr.mxu0 0.0
    %2393 = vmatpush2.msra.mxu0 %v2313
    %2394 = vmatprep.subr.mxu0 0.0
    %2395 = vmatpush2.msra.mxu0 %v2312
    %2396 = vmatprep.subr.mxu0 0.0
    %2397 = vmatpush2.msra.mxu0 %v2311
    %2398 = vmatprep.mubr.f32.mxu0 %v2288
    %2399 = vmatmul.mubr.f32.gmra.mxu0 %v2287
    %v2400 = vpop.f32.mrf.mxu0
    %v2401 = vadd.f32 %v2332, %v2400
    %v2402 = vpop.f32.mrf.mxu0
    %2403 = vmatprep.mubr.f32.mxu0 %v2290
    %2404 = vmatmul.mubr.f32.gmra.mxu0 %v2289
    %v2405 = vpop.f32.mrf.mxu0
    %v2406 = vadd.f32 %v2332, %v2405
    %v2407 = vpop.f32.mrf.mxu0
    %2408 = vmatprep.mubr.f32.mxu0 %v2292
    %2409 = vmatmul.mubr.f32.gmra.mxu0 %v2291
    %v2410 = vpop.f32.mrf.mxu0
    %v2411 = vadd.f32 %v2332, %v2410
    %v2412 = vpop.f32.mrf.mxu0
    %2413 = vmatprep.mubr.f32.mxu0 %v2294
    %2414 = vmatmul.mubr.f32.gmra.mxu0 %v2293
    %v2415 = vpop.f32.mrf.mxu0
    %v2416 = vadd.f32 %v2332, %v2415
    %v2417 = vpop.f32.mrf.mxu0
    %2418 = vdwg.mxu0
    %v2419 = vsub.f32 %v2401, %v2411
    %v2420 = vsub.f32 %v2406, %v2416
    %v2421 = vmul.f32 %v2419, %v2419
    %v2422 = vmul.f32 %v2420, %v2420
    %v2423 = vld [vmem:[%s8] sm:$0x1]
    %v2425 = vlaneseq
    %v2426 = vshrl.u32 %v2425, 7
    %v2427 = vsub.s32 0, %v2426
    %v2428 = vrot.slane %v2423, %v2427
    %v2430 = vmul.f32 %v2421, %v2428
    %v2431 = vmul.f32 %v2422, %v2428
    %2432 = vadd.xlane.f32.xlu0 %v2430
    %v2433 = vpop.xlane.xlu0 %2432
    %2434 = vadd.xlane.f32.xlu0 %v2431
    %v2435 = vpop.xlane.xlu0 %2434
    %v2436 = vld [vmem:[#allocation3] sm:$0x1]
    %v2438 = vlaneseq
    %v2439 = vshrl.u32 %v2438, 7
    %v2440 = vsub.s32 0, %v2439
    %v2441 = vrot.slane %v2436, %v2440
    %v2443 = vadd.f32 %v2433, %v2441
    %v2444 = vadd.f32 %v2435, %v2441
    %vm2445 = vcmask 7168
    %2446 = vst.msk [vmem:[%s10] sm:$0xff] %vm2445, %v2443
    %2447 = vst.msk [vmem:[%s10 + $0x8] sm:$0xff] %vm2445, %v2444
    // Predicated region
    $region50: #{id_discriminator_forward.1} parent=1 // pred_check
      _
    $region51: #{id_discriminator_forward.1} parent=1 // pred_check_branch
      %2449 = sbr.rel (0) target = $region53
    $region52: #{id_discriminator_forward.1} parent=1 // pred_region
      _
    $region53: #{id_discriminator_forward.1} parent=1 // pred_fallthru
      _
    // Predicated region
    $region54: #{id_discriminator_forward.1} parent=1 // pred_check
      _
    $region55: #{id_discriminator_forward.1} parent=1 // pred_check_branch
      %2451 = sbr.rel (0) target = $region57
    $region56: #{id_discriminator_forward.1} parent=1 // pred_region
      _
    $region57: #{id_discriminator_forward.1} parent=1 // pred_fallthru
      _
    %2452 = vsyncpa [#allocation5], 1
    %2453 = vsyncpa [#allocation7], 1

</llo_original>
